<compile_context>
chip_gen: v5e
topology: v5e:2x2
jax: 0.10.0
libtpu: 0.0.40
codegen_flags: <defaults>
</compile_context>

<pallas_src>
import functools

import jax
import jax.numpy as jnp
from jax.experimental import pallas as pl
from jax.experimental.pallas import tpu as pltpu


# Lane offsets inside the packed, lane-dense (rows, 128) output slab.
_OUT_LANE = 0      # main head logits        (h1*w1 rows, ncls lanes)
_AUX_LANE = 8      # auxiliary head logits   (h2*w2 rows, ncls lanes)
_FEAT_LANE = 16    # decoder features        (h1*w1 rows, cdec lanes)
_SLAB_LANES = 128


# --------------------------------------------------------------------------
# Fused kernel: whole forward for one batch element per grid step.
# --------------------------------------------------------------------------
def _segmenter_kernel(x_ref,                       # (H+2, W+2, Cin) padded
                      w1_ref, b1_ref,              # enc1: (9*Cin, C1), (1, C1)
                      w2_ref, b2_ref,              # enc2: (9*C1, C2), (1, C2)
                      d1_ref, d2_ref, bdec_ref,    # decoder 1x1 projections
                      hm_ref, bh_ref,              # main head 1x1
                      am_ref, ba_ref,              # auxiliary head 1x1
                      o_ref,                       # (h1*w1, 128) packed slab
                      f1p_ref, p2u_ref,            # VMEM scratch
                      *, write_features):
    f32 = jnp.float32

    def conv3x3_s2_bias_relu(src_ref, w_ref, b_ref):
        # Shallow im2col: 9 strided-tap reads (load path), one fat matmul.
        hp, wp, _ = src_ref.shape
        ho, wo = (hp - 2) // 2, (wp - 2) // 2
        taps = []
        for kh in range(3):
            for kw in range(3):
                taps.append(src_ref[pl.ds(kh, ho, stride=2),
                                    pl.ds(kw, wo, stride=2), :])
        patches = jnp.concatenate(taps, axis=-1)           # (ho, wo, 9*ci)
        patches = patches.reshape(ho * wo, patches.shape[-1])
        y = jnp.dot(patches, w_ref[...], preferred_element_type=f32)
        return jnp.maximum(y + b_ref[...], 0.0), ho, wo

    # ---- encoder: two 3x3 stride-2 conv+bias+ReLU stages ----
    f1, h1, w1 = conv3x3_s2_bias_relu(x_ref, w1_ref, b1_ref)    # (h1*w1, c1)
    c1 = f1.shape[-1]
    # zero-padded copy of f1 for the second conv's pad=1
    f1p_ref[...] = jnp.zeros(f1p_ref.shape, f32)
    f1p_ref[1:h1 + 1, 1:w1 + 1, :] = f1.reshape(h1, w1, c1)
    f2, h2, w2 = conv3x3_s2_bias_relu(f1p_ref, w2_ref, b2_ref)  # (h2*w2, c2)

    # ---- decoder: per-channel 1x1 projections + nearest-2x upsample + ReLU
    cdec = d1_ref.shape[1]
    p1 = jnp.dot(f1, d1_ref[...], preferred_element_type=f32)   # (h1*w1, cdec)
    p2 = jnp.dot(f2, d2_ref[...], preferred_element_type=f32)   # (h2*w2, cdec)
    p2_3d = p2.reshape(h2, w2, cdec)
    # nearest 2x upsample: scatter p2 into the 4 spatial phases (data movement
    # only, no MXU work)
    for a in range(2):
        for b in range(2):
            p2u_ref[pl.ds(a, h2, stride=2), pl.ds(b, w2, stride=2), :] = p2_3d
    p2u = p2u_ref[...].reshape(h1 * w1, cdec)
    # dec1_b + dec2_b folded into one constant (bias is unchanged by nearest
    # upsample).
    feat = jnp.maximum(p1 + p2u + bdec_ref[...], 0.0)           # (h1*w1, cdec)

    # ---- heads: main head on decoder features, auxiliary head on f2 ----
    ncls = hm_ref.shape[1]
    out = jnp.dot(feat, hm_ref[...], preferred_element_type=f32) + bh_ref[...]
    aux = jnp.dot(f2, am_ref[...], preferred_element_type=f32) + ba_ref[...]

    # ---- packed, lane-dense output slab (full-block HBM writeback) ----
    o_ref[...] = jnp.zeros(o_ref.shape, f32)
    o_ref[:, _OUT_LANE:_OUT_LANE + ncls] = out
    o_ref[0:h2 * w2, _AUX_LANE:_AUX_LANE + ncls] = aux
    if write_features:                    # only in the return_features variant
        o_ref[:, _FEAT_LANE:_FEAT_LANE + cdec] = feat


# --------------------------------------------------------------------------
# Offline weight preprocessing (spatial-size independent, tiny operands).
# --------------------------------------------------------------------------
def _conv3x3_weight_mat(w_oihw):
    """(Cout, Cin, 3, 3) PyTorch weight -> (9*Cin, Cout), rows ordered
    (kh, kw, ci) to match the tap-concat order inside the kernel."""
    co, ci, kh, kw = w_oihw.shape
    return jnp.transpose(w_oihw, (2, 3, 1, 0)).reshape(kh * kw * ci, co)


def prepare_params(params):
    return dict(
        w1=_conv3x3_weight_mat(params["enc1_w"]), b1=params["enc1_b"][None, :],
        w2=_conv3x3_weight_mat(params["enc2_w"]), b2=params["enc2_b"][None, :],
        d1=jnp.transpose(params["dec1_w"]),
        d2=jnp.transpose(params["dec2_w"]),
        bdec=(params["dec1_b"] + params["dec2_b"])[None, :],
        hm=jnp.transpose(params["head_w"]), bh=params["head_b"][None, :],
        am=jnp.transpose(params["aux_w"]), ba=params["aux_b"][None, :],
    )


# --------------------------------------------------------------------------
# Forward wrapper: one fused pallas_call, grid parallel over the batch.
# --------------------------------------------------------------------------
@functools.partial(jax.jit, static_argnames="return_features")
def segmenter_forward(x_nhwc, prepared, return_features=False):
    n, h, w, cin = x_nhwc.shape
    assert h % 4 == 0 and w % 4 == 0, "spatial dims must be divisible by 4"
    h1, w1, h2, w2 = h // 2, w // 2, h // 4, w // 4
    c1 = prepared["w1"].shape[1]
    c2 = prepared["w2"].shape[1]
    cdec = prepared["d1"].shape[1]
    ncls = prepared["hm"].shape[1]
    rows = h1 * w1
    assert ncls <= _AUX_LANE and _AUX_LANE + ncls <= _FEAT_LANE
    assert _FEAT_LANE + cdec <= _SLAB_LANES

    # pad=1 for the first conv handled in the wrapper (layout plumbing only)
    xp = jnp.pad(x_nhwc, ((0, 0), (1, 1), (1, 1), (0, 0)))

    order = ("w1", "b1", "w2", "b2", "d1", "d2", "bdec", "hm", "bh", "am", "ba")
    weights = tuple(prepared[k] for k in order)

    in_specs = (
        [pl.BlockSpec((None, h + 2, w + 2, cin), lambda i: (i, 0, 0, 0))]
        + [pl.BlockSpec(a.shape, lambda i: (0, 0)) for a in weights])
    out_spec = pl.BlockSpec((None, rows, _SLAB_LANES), lambda i: (i, 0, 0))

    # Advisory cost hint for XLA's scheduler around the fused call.
    macs = n * (rows * 9 * cin * c1 + (h2 * w2) * 9 * c1 * c2
                + rows * c1 * cdec + (h2 * w2) * c2 * cdec
                + rows * cdec * ncls + (h2 * w2) * c2 * ncls)
    bytes_accessed = 4 * (int(xp.size) + sum(int(a.size) for a in weights)
                          + n * rows * _SLAB_LANES)

    kernel = functools.partial(_segmenter_kernel,
                               write_features=return_features)

    slab = pl.pallas_call(
        kernel,
        out_shape=jax.ShapeDtypeStruct((n, rows, _SLAB_LANES), jnp.float32),
        grid=(n,),
        in_specs=in_specs,
        out_specs=out_spec,
        scratch_shapes=[pltpu.VMEM((h1 + 2, w1 + 2, c1), jnp.float32),
                        pltpu.VMEM((h1, w1, cdec), jnp.float32)],
        compiler_params=pltpu.CompilerParams(
            dimension_semantics=("parallel",),
            vmem_limit_bytes=32 * 1024 * 1024),
        cost_estimate=pl.CostEstimate(flops=2 * macs, transcendentals=0,
                                      bytes_accessed=int(bytes_accessed)),
    )(xp, *weights)

    out = slab[:, :, _OUT_LANE:_OUT_LANE + ncls].reshape(n, h1, w1, ncls)
    aux = slab[:, :h2 * w2, _AUX_LANE:_AUX_LANE + ncls].reshape(n, h2, w2, ncls)
    if return_features:
        feat = slab[:, :, _FEAT_LANE:_FEAT_LANE + cdec].reshape(n, h1, w1, cdec)
        return (out, aux), feat
    return out, aux


# --------------------------------------------------------------------------
# Pure-JAX reference (for the correctness check)
# --------------------------------------------------------------------------
def _ref_conv3x3_s2_relu(x, w_oihw, b):
    y = jax.lax.conv_general_dilated(
        x, jnp.transpose(w_oihw, (2, 3, 1, 0)),
        window_strides=(2, 2), padding=((1, 1), (1, 1)),
        dimension_numbers=("NHWC", "HWIO", "NHWC"))
    return jnp.maximum(y + b, 0.0)


def _ref_forward(x, p):
    f1 = _ref_conv3x3_s2_relu(x, p["enc1_w"], p["enc1_b"])
    f2 = _ref_conv3x3_s2_relu(f1, p["enc2_w"], p["enc2_b"])
    p1 = jnp.einsum("nhwc,oc->nhwo", f1, p["dec1_w"]) + p["dec1_b"]
    p2 = jnp.einsum("nhwc,oc->nhwo", f2, p["dec2_w"]) + p["dec2_b"]
    p2u = jnp.repeat(jnp.repeat(p2, 2, axis=1), 2, axis=2)
    feats = jnp.maximum(p1 + p2u, 0.0)
    out = jnp.einsum("nhwc,oc->nhwo", feats, p["head_w"]) + p["head_b"]
    aux = jnp.einsum("nhwc,oc->nhwo", f2, p["aux_w"]) + p["aux_b"]
    return out, aux, feats


# --------------------------------------------------------------------------
if __name__ == "__main__":
    key = jax.random.PRNGKey(0)
    ks = jax.random.split(key, 14)

    C_IN, C1, C2, C_DEC, N_CLS = 4, 8, 16, 16, 3

    params = {
        # encoder stage 1: Conv2d(4, 8, 3, stride=2, padding=1)
        "enc1_w": 0.1 * jax.random.normal(ks[0], (C1, C_IN, 3, 3), jnp.float32),
        "enc1_b": 0.1 * jax.random.normal(ks[1], (C1,), jnp.float32),
        # encoder stage 2: Conv2d(8, 16, 3, stride=2, padding=1)
        "enc2_w": 0.1 * jax.random.normal(ks[2], (C2, C1, 3, 3), jnp.float32),
        "enc2_b": 0.1 * jax.random.normal(ks[3], (C2,), jnp.float32),
        # decoder projections: Conv2d(8, 16, 1), Conv2d(16, 16, 1)
        "dec1_w": 0.1 * jax.random.normal(ks[4], (C_DEC, C1), jnp.float32),
        "dec1_b": 0.1 * jax.random.normal(ks[5], (C_DEC,), jnp.float32),
        "dec2_w": 0.1 * jax.random.normal(ks[6], (C_DEC, C2), jnp.float32),
        "dec2_b": 0.1 * jax.random.normal(ks[7], (C_DEC,), jnp.float32),
        # main head: Conv2d(16, 3, 1) on decoder features
        "head_w": 0.1 * jax.random.normal(ks[8], (N_CLS, C_DEC), jnp.float32),
        "head_b": 0.1 * jax.random.normal(ks[9], (N_CLS,), jnp.float32),
        # auxiliary head: Conv2d(16, 3, 1) on the deepest encoder feature
        "aux_w": 0.1 * jax.random.normal(ks[10], (N_CLS, C2), jnp.float32),
        "aux_b": 0.1 * jax.random.normal(ks[11], (N_CLS,), jnp.float32),
    }

    # PyTorch-equivalent input: (2, 4, 16, 16) NCHW -> NHWC for the kernel.
    x_nchw = jax.random.normal(ks[12], (2, C_IN, 16, 16), jnp.float32)
    x_nhwc = jnp.transpose(x_nchw, (0, 2, 3, 1))

    prepared = prepare_params(params)

    # MultiBranchSegmenter.forward: (out, aux)
    out, aux = jax.block_until_ready(segmenter_forward(x_nhwc, prepared))
    assert out.shape == (2, 8, 8, N_CLS), out.shape
    assert aux.shape == (2, 4, 4, N_CLS), aux.shape

    # return_features=True path: ((out, aux), features)
    (out_f, aux_f), feats = jax.block_until_ready(
        segmenter_forward(x_nhwc, prepared, return_features=True))
    assert feats.shape == (2, 8, 8, C_DEC), feats.shape

    ref_out, ref_aux, ref_feats = jax.block_until_ready(
        _ref_forward(x_nhwc, params))

    def _check(a, b, name):
        err = float(jnp.max(jnp.abs(a - b)))
        assert jnp.allclose(a, b, atol=1e-3, rtol=1e-3), (name, err)

    _check(out, ref_out, "out")
    _check(aux, ref_aux, "aux")
    _check(out_f, ref_out, "out(return_features)")
    _check(aux_f, ref_aux, "aux(return_features)")
    _check(feats, ref_feats, "features")

    print("KERNEL_OK")
</pallas_src>

<mosaic_0001>
module attributes {stable_mosaic.version = 11 : i64} {
  func.func @_segmenter_kernel(%arg0: i32, %arg1: memref<1x18x18x4xf32, #tpu.memory_space<vmem>>, %arg2: memref<36x8xf32, #tpu.memory_space<vmem>>, %arg3: memref<1x8xf32, #tpu.memory_space<vmem>>, %arg4: memref<72x16xf32, #tpu.memory_space<vmem>>, %arg5: memref<1x16xf32, #tpu.memory_space<vmem>>, %arg6: memref<8x16xf32, #tpu.memory_space<vmem>>, %arg7: memref<16x16xf32, #tpu.memory_space<vmem>>, %arg8: memref<1x16xf32, #tpu.memory_space<vmem>>, %arg9: memref<16x3xf32, #tpu.memory_space<vmem>>, %arg10: memref<1x3xf32, #tpu.memory_space<vmem>>, %arg11: memref<16x3xf32, #tpu.memory_space<vmem>>, %arg12: memref<1x3xf32, #tpu.memory_space<vmem>>, %arg13: memref<1x64x128xf32, #tpu.memory_space<vmem>>, %arg14: memref<10x10x8xf32, #tpu.memory_space<vmem>>, %arg15: memref<8x8x16xf32, #tpu.memory_space<vmem>>) attributes {dimension_semantics = [#tpu.dimension_semantics<parallel>], iteration_bounds = array<i64: 2>, scalar_prefetch = 0 : i64, scratch_operands = 2 : i64, tpu.core_type = #tpu.core_type<tc>, window_params = [{transform_indices = @transform_0, window_bounds = array<i64: 1, 18, 18, 4>}, {pipeline_mode = #tpu.pipeline_mode<synchronous>, transform_indices = @transform_1, window_bounds = array<i64: 36, 8>}, {pipeline_mode = #tpu.pipeline_mode<synchronous>, transform_indices = @transform_2, window_bounds = array<i64: 1, 8>}, {pipeline_mode = #tpu.pipeline_mode<synchronous>, transform_indices = @transform_3, window_bounds = array<i64: 72, 16>}, {pipeline_mode = #tpu.pipeline_mode<synchronous>, transform_indices = @transform_4, window_bounds = array<i64: 1, 16>}, {pipeline_mode = #tpu.pipeline_mode<synchronous>, transform_indices = @transform_5, window_bounds = array<i64: 8, 16>}, {pipeline_mode = #tpu.pipeline_mode<synchronous>, transform_indices = @transform_6, window_bounds = array<i64: 16, 16>}, {pipeline_mode = #tpu.pipeline_mode<synchronous>, transform_indices = @transform_7, window_bounds = array<i64: 1, 16>}, {pipeline_mode = #tpu.pipeline_mode<synchronous>, transform_indices = @transform_8, window_bounds = array<i64: 16, 3>}, {pipeline_mode = #tpu.pipeline_mode<synchronous>, transform_indices = @transform_9, window_bounds = array<i64: 1, 3>}, {pipeline_mode = #tpu.pipeline_mode<synchronous>, transform_indices = @transform_10, window_bounds = array<i64: 16, 3>}, {pipeline_mode = #tpu.pipeline_mode<synchronous>, transform_indices = @transform_11, window_bounds = array<i64: 1, 3>}, {transform_indices = @transform_12, window_bounds = array<i64: 1, 64, 128>}]} {
    %c0 = arith.constant 0 : index
    %c0_0 = arith.constant 0 : index
    %c0_1 = arith.constant 0 : index
    %c0_2 = arith.constant 0 : index
    %0 = tpu.strided_load %arg1[%c0, %c0_0, %c0_1, %c0_2] {strides = array<i32: 1, 2, 2, 1>} : memref<1x18x18x4xf32, #tpu.memory_space<vmem>>, vector<1x8x8x4xf32>
    %1 = vector.shape_cast %0 : vector<1x8x8x4xf32> to vector<8x8x4xf32>
    %c0_3 = arith.constant 0 : index
    %c0_4 = arith.constant 0 : index
    %c1 = arith.constant 1 : index
    %c0_5 = arith.constant 0 : index
    %2 = tpu.strided_load %arg1[%c0_3, %c0_4, %c1, %c0_5] {strides = array<i32: 1, 2, 2, 1>} : memref<1x18x18x4xf32, #tpu.memory_space<vmem>>, vector<1x8x8x4xf32>
    %3 = vector.shape_cast %2 : vector<1x8x8x4xf32> to vector<8x8x4xf32>
    %c0_6 = arith.constant 0 : index
    %c0_7 = arith.constant 0 : index
    %c2 = arith.constant 2 : index
    %c0_8 = arith.constant 0 : index
    %4 = tpu.strided_load %arg1[%c0_6, %c0_7, %c2, %c0_8] {strides = array<i32: 1, 2, 2, 1>} : memref<1x18x18x4xf32, #tpu.memory_space<vmem>>, vector<1x8x8x4xf32>
    %5 = vector.shape_cast %4 : vector<1x8x8x4xf32> to vector<8x8x4xf32>
    %c0_9 = arith.constant 0 : index
    %c1_10 = arith.constant 1 : index
    %c0_11 = arith.constant 0 : index
    %c0_12 = arith.constant 0 : index
    %6 = tpu.strided_load %arg1[%c0_9, %c1_10, %c0_11, %c0_12] {strides = array<i32: 1, 2, 2, 1>} : memref<1x18x18x4xf32, #tpu.memory_space<vmem>>, vector<1x8x8x4xf32>
    %7 = vector.shape_cast %6 : vector<1x8x8x4xf32> to vector<8x8x4xf32>
    %c0_13 = arith.constant 0 : index
    %c1_14 = arith.constant 1 : index
    %c1_15 = arith.constant 1 : index
    %c0_16 = arith.constant 0 : index
    %8 = tpu.strided_load %arg1[%c0_13, %c1_14, %c1_15, %c0_16] {strides = array<i32: 1, 2, 2, 1>} : memref<1x18x18x4xf32, #tpu.memory_space<vmem>>, vector<1x8x8x4xf32>
    %9 = vector.shape_cast %8 : vector<1x8x8x4xf32> to vector<8x8x4xf32>
    %c0_17 = arith.constant 0 : index
    %c1_18 = arith.constant 1 : index
    %c2_19 = arith.constant 2 : index
    %c0_20 = arith.constant 0 : index
    %10 = tpu.strided_load %arg1[%c0_17, %c1_18, %c2_19, %c0_20] {strides = array<i32: 1, 2, 2, 1>} : memref<1x18x18x4xf32, #tpu.memory_space<vmem>>, vector<1x8x8x4xf32>
    %11 = vector.shape_cast %10 : vector<1x8x8x4xf32> to vector<8x8x4xf32>
    %c0_21 = arith.constant 0 : index
    %c2_22 = arith.constant 2 : index
    %c0_23 = arith.constant 0 : index
    %c0_24 = arith.constant 0 : index
    %12 = tpu.strided_load %arg1[%c0_21, %c2_22, %c0_23, %c0_24] {strides = array<i32: 1, 2, 2, 1>} : memref<1x18x18x4xf32, #tpu.memory_space<vmem>>, vector<1x8x8x4xf32>
    %13 = vector.shape_cast %12 : vector<1x8x8x4xf32> to vector<8x8x4xf32>
    %c0_25 = arith.constant 0 : index
    %c2_26 = arith.constant 2 : index
    %c1_27 = arith.constant 1 : index
    %c0_28 = arith.constant 0 : index
    %14 = tpu.strided_load %arg1[%c0_25, %c2_26, %c1_27, %c0_28] {strides = array<i32: 1, 2, 2, 1>} : memref<1x18x18x4xf32, #tpu.memory_space<vmem>>, vector<1x8x8x4xf32>
    %15 = vector.shape_cast %14 : vector<1x8x8x4xf32> to vector<8x8x4xf32>
    %c0_29 = arith.constant 0 : index
    %c2_30 = arith.constant 2 : index
    %c2_31 = arith.constant 2 : index
    %c0_32 = arith.constant 0 : index
    %16 = tpu.strided_load %arg1[%c0_29, %c2_30, %c2_31, %c0_32] {strides = array<i32: 1, 2, 2, 1>} : memref<1x18x18x4xf32, #tpu.memory_space<vmem>>, vector<1x8x8x4xf32>
    %17 = vector.shape_cast %16 : vector<1x8x8x4xf32> to vector<8x8x4xf32>
    %18 = tpu.concatenate %1, %3, %5, %7, %9, %11, %13, %15, %17 in 2 : vector<8x8x4xf32>, vector<8x8x4xf32>, vector<8x8x4xf32>, vector<8x8x4xf32>, vector<8x8x4xf32>, vector<8x8x4xf32>, vector<8x8x4xf32>, vector<8x8x4xf32>, vector<8x8x4xf32> -> vector<8x8x36xf32>
    %19 = vector.shape_cast %18 : vector<8x8x36xf32> to vector<64x36xf32>
    %c0_33 = arith.constant 0 : index
    %c0_34 = arith.constant 0 : index
    %20 = vector.load %arg2[%c0_33, %c0_34] : memref<36x8xf32, #tpu.memory_space<vmem>>, vector<36x8xf32>
    %cst = arith.constant dense<0.000000e+00> : vector<64x8xf32>
    %21 = tpu.matmul %19, %20, %cst {dimension_numbers = #tpu.dot_dimension_numbers<[1], [0], [0], [1], [0, 0, 1, 1], [], []>} : vector<64x36xf32>, vector<36x8xf32>, vector<64x8xf32> -> vector<64x8xf32>
    %c0_35 = arith.constant 0 : index
    %c0_36 = arith.constant 0 : index
    %22 = vector.load %arg3[%c0_35, %c0_36] : memref<1x8xf32, #tpu.memory_space<vmem>>, vector<1x8xf32>
    %23 = vector.broadcast %22 : vector<1x8xf32> to vector<64x8xf32>
    %24 = arith.addf %21, %23 : vector<64x8xf32>
    %cst_37 = arith.constant 0.000000e+00 : f32
    %25 = vector.broadcast %cst_37 : f32 to vector<64x8xf32>
    %26 = arith.maximumf %24, %25 : vector<64x8xf32>
    %cst_38 = arith.constant 0.000000e+00 : f32
    %27 = vector.broadcast %cst_38 : f32 to vector<10x10x8xf32>
    %c0_39 = arith.constant 0 : index
    %c0_40 = arith.constant 0 : index
    %c0_41 = arith.constant 0 : index
    %28 = vector.load %arg14[%c0_39, %c0_40, %c0_41] : memref<10x10x8xf32, #tpu.memory_space<vmem>>, vector<10x10x8xf32>
    tpu.vector_store %arg14[%c0_39, %c0_40, %c0_41], %27 {strides = array<i32>} : memref<10x10x8xf32, #tpu.memory_space<vmem>>, vector<10x10x8xf32>,
    %29 = vector.shape_cast %26 : vector<64x8xf32> to vector<8x8x8xf32>
    %c1_42 = arith.constant 1 : index
    %c1_43 = arith.constant 1 : index
    %c0_44 = arith.constant 0 : index
    %30 = vector.load %arg14[%c1_42, %c1_43, %c0_44] : memref<10x10x8xf32, #tpu.memory_space<vmem>>, vector<8x8x8xf32>
    tpu.vector_store %arg14[%c1_42, %c1_43, %c0_44], %29 {strides = array<i32>} : memref<10x10x8xf32, #tpu.memory_space<vmem>>, vector<8x8x8xf32>,
    %c0_45 = arith.constant 0 : index
    %c0_46 = arith.constant 0 : index
    %c0_47 = arith.constant 0 : index
    %31 = tpu.strided_load %arg14[%c0_45, %c0_46, %c0_47] {strides = array<i32: 2, 2, 1>} : memref<10x10x8xf32, #tpu.memory_space<vmem>>, vector<4x4x8xf32>
    %c0_48 = arith.constant 0 : index
    %c1_49 = arith.constant 1 : index
    %c0_50 = arith.constant 0 : index
    %32 = tpu.strided_load %arg14[%c0_48, %c1_49, %c0_50] {strides = array<i32: 2, 2, 1>} : memref<10x10x8xf32, #tpu.memory_space<vmem>>, vector<4x4x8xf32>
    %c0_51 = arith.constant 0 : index
    %c2_52 = arith.constant 2 : index
    %c0_53 = arith.constant 0 : index
    %33 = tpu.strided_load %arg14[%c0_51, %c2_52, %c0_53] {strides = array<i32: 2, 2, 1>} : memref<10x10x8xf32, #tpu.memory_space<vmem>>, vector<4x4x8xf32>
    %c1_54 = arith.constant 1 : index
    %c0_55 = arith.constant 0 : index
    %c0_56 = arith.constant 0 : index
    %34 = tpu.strided_load %arg14[%c1_54, %c0_55, %c0_56] {strides = array<i32: 2, 2, 1>} : memref<10x10x8xf32, #tpu.memory_space<vmem>>, vector<4x4x8xf32>
    %c1_57 = arith.constant 1 : index
    %c1_58 = arith.constant 1 : index
    %c0_59 = arith.constant 0 : index
    %35 = tpu.strided_load %arg14[%c1_57, %c1_58, %c0_59] {strides = array<i32: 2, 2, 1>} : memref<10x10x8xf32, #tpu.memory_space<vmem>>, vector<4x4x8xf32>
    %c1_60 = arith.constant 1 : index
    %c2_61 = arith.constant 2 : index
    %c0_62 = arith.constant 0 : index
    %36 = tpu.strided_load %arg14[%c1_60, %c2_61, %c0_62] {strides = array<i32: 2, 2, 1>} : memref<10x10x8xf32, #tpu.memory_space<vmem>>, vector<4x4x8xf32>
    %c2_63 = arith.constant 2 : index
    %c0_64 = arith.constant 0 : index
    %c0_65 = arith.constant 0 : index
    %37 = tpu.strided_load %arg14[%c2_63, %c0_64, %c0_65] {strides = array<i32: 2, 2, 1>} : memref<10x10x8xf32, #tpu.memory_space<vmem>>, vector<4x4x8xf32>
    %c2_66 = arith.constant 2 : index
    %c1_67 = arith.constant 1 : index
    %c0_68 = arith.constant 0 : index
    %38 = tpu.strided_load %arg14[%c2_66, %c1_67, %c0_68] {strides = array<i32: 2, 2, 1>} : memref<10x10x8xf32, #tpu.memory_space<vmem>>, vector<4x4x8xf32>
    %c2_69 = arith.constant 2 : index
    %c2_70 = arith.constant 2 : index
    %c0_71 = arith.constant 0 : index
    %39 = tpu.strided_load %arg14[%c2_69, %c2_70, %c0_71] {strides = array<i32: 2, 2, 1>} : memref<10x10x8xf32, #tpu.memory_space<vmem>>, vector<4x4x8xf32>
    %40 = tpu.concatenate %31, %32, %33, %34, %35, %36, %37, %38, %39 in 2 : vector<4x4x8xf32>, vector<4x4x8xf32>, vector<4x4x8xf32>, vector<4x4x8xf32>, vector<4x4x8xf32>, vector<4x4x8xf32>, vector<4x4x8xf32>, vector<4x4x8xf32>, vector<4x4x8xf32> -> vector<4x4x72xf32>
    %41 = vector.shape_cast %40 : vector<4x4x72xf32> to vector<16x72xf32>
    %c0_72 = arith.constant 0 : index
    %c0_73 = arith.constant 0 : index
    %42 = vector.load %arg4[%c0_72, %c0_73] : memref<72x16xf32, #tpu.memory_space<vmem>>, vector<72x16xf32>
    %cst_74 = arith.constant dense<0.000000e+00> : vector<16x16xf32>
    %43 = tpu.matmul %41, %42, %cst_74 {dimension_numbers = #tpu.dot_dimension_numbers<[1], [0], [0], [1], [0, 0, 1, 1], [], []>} : vector<16x72xf32>, vector<72x16xf32>, vector<16x16xf32> -> vector<16x16xf32>
    %c0_75 = arith.constant 0 : index
    %c0_76 = arith.constant 0 : index
    %44 = vector.load %arg5[%c0_75, %c0_76] : memref<1x16xf32, #tpu.memory_space<vmem>>, vector<1x16xf32>
    %45 = vector.broadcast %44 : vector<1x16xf32> to vector<16x16xf32>
    %46 = arith.addf %43, %45 : vector<16x16xf32>
    %cst_77 = arith.constant 0.000000e+00 : f32
    %47 = vector.broadcast %cst_77 : f32 to vector<16x16xf32>
    %48 = arith.maximumf %46, %47 : vector<16x16xf32>
    %c0_78 = arith.constant 0 : index
    %c0_79 = arith.constant 0 : index
    %49 = vector.load %arg6[%c0_78, %c0_79] : memref<8x16xf32, #tpu.memory_space<vmem>>, vector<8x16xf32>
    %cst_80 = arith.constant dense<0.000000e+00> : vector<64x16xf32>
    %50 = tpu.matmul %26, %49, %cst_80 {dimension_numbers = #tpu.dot_dimension_numbers<[1], [0], [0], [1], [0, 0, 1, 1], [], []>} : vector<64x8xf32>, vector<8x16xf32>, vector<64x16xf32> -> vector<64x16xf32>
    %c0_81 = arith.constant 0 : index
    %c0_82 = arith.constant 0 : index
    %51 = vector.load %arg7[%c0_81, %c0_82] : memref<16x16xf32, #tpu.memory_space<vmem>>, vector<16x16xf32>
    %cst_83 = arith.constant dense<0.000000e+00> : vector<16x16xf32>
    %52 = tpu.matmul %48, %51, %cst_83 {dimension_numbers = #tpu.dot_dimension_numbers<[1], [0], [0], [1], [0, 0, 1, 1], [], []>} : vector<16x16xf32>, vector<16x16xf32>, vector<16x16xf32> -> vector<16x16xf32>
    %53 = vector.shape_cast %52 : vector<16x16xf32> to vector<4x4x16xf32>
    %c0_84 = arith.constant 0 : index
    %c0_85 = arith.constant 0 : index
    %c0_86 = arith.constant 0 : index
    %54 = tpu.strided_load %arg15[%c0_84, %c0_85, %c0_86] {strides = array<i32: 2, 2, 1>} : memref<8x8x16xf32, #tpu.memory_space<vmem>>, vector<4x4x16xf32>
    tpu.strided_store %arg15[%c0_84, %c0_85, %c0_86], %53 {strides = array<i32: 2, 2, 1>} : memref<8x8x16xf32, #tpu.memory_space<vmem>>, vector<4x4x16xf32>
    %c0_87 = arith.constant 0 : index
    %c1_88 = arith.constant 1 : index
    %c0_89 = arith.constant 0 : index
    %55 = tpu.strided_load %arg15[%c0_87, %c1_88, %c0_89] {strides = array<i32: 2, 2, 1>} : memref<8x8x16xf32, #tpu.memory_space<vmem>>, vector<4x4x16xf32>
    tpu.strided_store %arg15[%c0_87, %c1_88, %c0_89], %53 {strides = array<i32: 2, 2, 1>} : memref<8x8x16xf32, #tpu.memory_space<vmem>>, vector<4x4x16xf32>
    %c1_90 = arith.constant 1 : index
    %c0_91 = arith.constant 0 : index
    %c0_92 = arith.constant 0 : index
    %56 = tpu.strided_load %arg15[%c1_90, %c0_91, %c0_92] {strides = array<i32: 2, 2, 1>} : memref<8x8x16xf32, #tpu.memory_space<vmem>>, vector<4x4x16xf32>
    tpu.strided_store %arg15[%c1_90, %c0_91, %c0_92], %53 {strides = array<i32: 2, 2, 1>} : memref<8x8x16xf32, #tpu.memory_space<vmem>>, vector<4x4x16xf32>
    %c1_93 = arith.constant 1 : index
    %c1_94 = arith.constant 1 : index
    %c0_95 = arith.constant 0 : index
    %57 = tpu.strided_load %arg15[%c1_93, %c1_94, %c0_95] {strides = array<i32: 2, 2, 1>} : memref<8x8x16xf32, #tpu.memory_space<vmem>>, vector<4x4x16xf32>
    tpu.strided_store %arg15[%c1_93, %c1_94, %c0_95], %53 {strides = array<i32: 2, 2, 1>} : memref<8x8x16xf32, #tpu.memory_space<vmem>>, vector<4x4x16xf32>
    %c0_96 = arith.constant 0 : index
    %c0_97 = arith.constant 0 : index
    %c0_98 = arith.constant 0 : index
    %58 = vector.load %arg15[%c0_96, %c0_97, %c0_98] : memref<8x8x16xf32, #tpu.memory_space<vmem>>, vector<8x8x16xf32>
    %59 = vector.shape_cast %58 : vector<8x8x16xf32> to vector<64x16xf32>
    %60 = arith.addf %50, %59 : vector<64x16xf32>
    %c0_99 = arith.constant 0 : index
    %c0_100 = arith.constant 0 : index
    %61 = vector.load %arg8[%c0_99, %c0_100] : memref<1x16xf32, #tpu.memory_space<vmem>>, vector<1x16xf32>
    %62 = vector.broadcast %61 : vector<1x16xf32> to vector<64x16xf32>
    %63 = arith.addf %60, %62 : vector<64x16xf32>
    %cst_101 = arith.constant 0.000000e+00 : f32
    %64 = vector.broadcast %cst_101 : f32 to vector<64x16xf32>
    %65 = arith.maximumf %63, %64 : vector<64x16xf32>
    %c0_102 = arith.constant 0 : index
    %c0_103 = arith.constant 0 : index
    %66 = vector.load %arg9[%c0_102, %c0_103] : memref<16x3xf32, #tpu.memory_space<vmem>>, vector<16x3xf32>
    %cst_104 = arith.constant dense<0.000000e+00> : vector<64x3xf32>
    %67 = tpu.matmul %65, %66, %cst_104 {dimension_numbers = #tpu.dot_dimension_numbers<[1], [0], [0], [1], [0, 0, 1, 1], [], []>} : vector<64x16xf32>, vector<16x3xf32>, vector<64x3xf32> -> vector<64x3xf32>
    %c0_105 = arith.constant 0 : index
    %c0_106 = arith.constant 0 : index
    %68 = vector.load %arg10[%c0_105, %c0_106] : memref<1x3xf32, #tpu.memory_space<vmem>>, vector<1x3xf32>
    %69 = vector.broadcast %68 : vector<1x3xf32> to vector<64x3xf32>
    %70 = arith.addf %67, %69 : vector<64x3xf32>
    %c0_107 = arith.constant 0 : index
    %c0_108 = arith.constant 0 : index
    %71 = vector.load %arg11[%c0_107, %c0_108] : memref<16x3xf32, #tpu.memory_space<vmem>>, vector<16x3xf32>
    %cst_109 = arith.constant dense<0.000000e+00> : vector<16x3xf32>
    %72 = tpu.matmul %48, %71, %cst_109 {dimension_numbers = #tpu.dot_dimension_numbers<[1], [0], [0], [1], [0, 0, 1, 1], [], []>} : vector<16x16xf32>, vector<16x3xf32>, vector<16x3xf32> -> vector<16x3xf32>
    %c0_110 = arith.constant 0 : index
    %c0_111 = arith.constant 0 : index
    %73 = vector.load %arg12[%c0_110, %c0_111] : memref<1x3xf32, #tpu.memory_space<vmem>>, vector<1x3xf32>
    %74 = vector.broadcast %73 : vector<1x3xf32> to vector<16x3xf32>
    %75 = arith.addf %72, %74 : vector<16x3xf32>
    %cst_112 = arith.constant 0.000000e+00 : f32
    %76 = vector.broadcast %cst_112 : f32 to vector<64x128xf32>
    %c0_113 = arith.constant 0 : index
    %c0_114 = arith.constant 0 : index
    %c0_115 = arith.constant 0 : index
    %77 = vector.load %arg13[%c0_113, %c0_114, %c0_115] : memref<1x64x128xf32, #tpu.memory_space<vmem>>, vector<1x64x128xf32>
    %78 = vector.shape_cast %77 : vector<1x64x128xf32> to vector<64x128xf32>
    %79 = vector.shape_cast %76 : vector<64x128xf32> to vector<1x64x128xf32>
    tpu.vector_store %arg13[%c0_113, %c0_114, %c0_115], %79 {strides = array<i32>} : memref<1x64x128xf32, #tpu.memory_space<vmem>>, vector<1x64x128xf32>,
    %c0_116 = arith.constant 0 : index
    %c0_117 = arith.constant 0 : index
    %c0_118 = arith.constant 0 : index
    %80 = vector.load %arg13[%c0_116, %c0_117, %c0_118] : memref<1x64x128xf32, #tpu.memory_space<vmem>>, vector<1x64x3xf32>
    %81 = vector.shape_cast %80 : vector<1x64x3xf32> to vector<64x3xf32>
    %82 = vector.shape_cast %70 : vector<64x3xf32> to vector<1x64x3xf32>
    tpu.vector_store %arg13[%c0_116, %c0_117, %c0_118], %82 {strides = array<i32>} : memref<1x64x128xf32, #tpu.memory_space<vmem>>, vector<1x64x3xf32>,
    %c0_119 = arith.constant 0 : index
    %c0_120 = arith.constant 0 : index
    %c8 = arith.constant 8 : index
    %83 = vector.load %arg13[%c0_119, %c0_120, %c8] : memref<1x64x128xf32, #tpu.memory_space<vmem>>, vector<1x16x3xf32>
    %84 = vector.shape_cast %83 : vector<1x16x3xf32> to vector<16x3xf32>
    %85 = vector.shape_cast %75 : vector<16x3xf32> to vector<1x16x3xf32>
    tpu.vector_store %arg13[%c0_119, %c0_120, %c8], %85 {strides = array<i32>} : memref<1x64x128xf32, #tpu.memory_space<vmem>>, vector<1x16x3xf32>,
    return
  }
  func.func @transform_0(%arg0: i32) -> (i32, i32, i32, i32) {
    %c0_i32 = arith.constant 0 : i32
    %c0_i32_0 = arith.constant 0 : i32
    %c0_i32_1 = arith.constant 0 : i32
    %c0_i32_2 = arith.constant 0 : i32
    return %arg0, %c0_i32, %c0_i32_0, %c0_i32_1 : i32, i32, i32, i32
  }
  func.func @transform_1(%arg0: i32) -> (i32, i32) {
    %c0_i32 = arith.constant 0 : i32
    %c0_i32_0 = arith.constant 0 : i32
    %c0_i32_1 = arith.constant 0 : i32
    return %c0_i32, %c0_i32_0 : i32, i32
  }
  func.func @transform_2(%arg0: i32) -> (i32, i32) {
    %c0_i32 = arith.constant 0 : i32
    %c0_i32_0 = arith.constant 0 : i32
    %c0_i32_1 = arith.constant 0 : i32
    return %c0_i32, %c0_i32_0 : i32, i32
  }
  func.func @transform_3(%arg0: i32) -> (i32, i32) {
    %c0_i32 = arith.constant 0 : i32
    %c0_i32_0 = arith.constant 0 : i32
    %c0_i32_1 = arith.constant 0 : i32
    return %c0_i32, %c0_i32_0 : i32, i32
  }
  func.func @transform_4(%arg0: i32) -> (i32, i32) {
    %c0_i32 = arith.constant 0 : i32
    %c0_i32_0 = arith.constant 0 : i32
    %c0_i32_1 = arith.constant 0 : i32
    return %c0_i32, %c0_i32_0 : i32, i32
  }
  func.func @transform_5(%arg0: i32) -> (i32, i32) {
    %c0_i32 = arith.constant 0 : i32
    %c0_i32_0 = arith.constant 0 : i32
    %c0_i32_1 = arith.constant 0 : i32
    return %c0_i32, %c0_i32_0 : i32, i32
  }
  func.func @transform_6(%arg0: i32) -> (i32, i32) {
    %c0_i32 = arith.constant 0 : i32
    %c0_i32_0 = arith.constant 0 : i32
    %c0_i32_1 = arith.constant 0 : i32
    return %c0_i32, %c0_i32_0 : i32, i32
  }
  func.func @transform_7(%arg0: i32) -> (i32, i32) {
    %c0_i32 = arith.constant 0 : i32
    %c0_i32_0 = arith.constant 0 : i32
    %c0_i32_1 = arith.constant 0 : i32
    return %c0_i32, %c0_i32_0 : i32, i32
  }
  func.func @transform_8(%arg0: i32) -> (i32, i32) {
    %c0_i32 = arith.constant 0 : i32
    %c0_i32_0 = arith.constant 0 : i32
    %c0_i32_1 = arith.constant 0 : i32
    return %c0_i32, %c0_i32_0 : i32, i32
  }
  func.func @transform_9(%arg0: i32) -> (i32, i32) {
    %c0_i32 = arith.constant 0 : i32
    %c0_i32_0 = arith.constant 0 : i32
    %c0_i32_1 = arith.constant 0 : i32
    return %c0_i32, %c0_i32_0 : i32, i32
  }
  func.func @transform_10(%arg0: i32) -> (i32, i32) {
    %c0_i32 = arith.constant 0 : i32
    %c0_i32_0 = arith.constant 0 : i32
    %c0_i32_1 = arith.constant 0 : i32
    return %c0_i32, %c0_i32_0 : i32, i32
  }
  func.func @transform_11(%arg0: i32) -> (i32, i32) {
    %c0_i32 = arith.constant 0 : i32
    %c0_i32_0 = arith.constant 0 : i32
    %c0_i32_1 = arith.constant 0 : i32
    return %c0_i32, %c0_i32_0 : i32, i32
  }
  func.func @transform_12(%arg0: i32) -> (i32, i32, i32) {
    %c0_i32 = arith.constant 0 : i32
    %c0_i32_0 = arith.constant 0 : i32
    %c0_i32_1 = arith.constant 0 : i32
    return %arg0, %c0_i32, %c0_i32_0 : i32, i32, i32
  }
}

</mosaic_0001>

<llo_original>
// kernel: segmenter_forward.1
$region0: #{segmenter_forward.1}
  #allocation0 [shape = 'u32[]', space=smem, size = 0x4, offset = 0x4, fixed_abs, tag = 'smem constant byte address 0x4 - core index']
  #allocation1 [shape = 'u32[72,128]{1,0:T(1,128)}', space=vmem, size = 0x9000, scoped, tag = 'internal scratch']
  #allocation2 [shape = 'f32[10,10,8]{2,1,0:T(8,128)}', space=vmem, size = 0x14000, scoped, tag = 'scratch operand']
  #allocation3 [shape = 'f32[8,8,16]{2,1,0:T(8,128)}', space=vmem, size = 0x8000, scoped, tag = 'scratch operand']
  %s0 = inlined_call_operand.vmem [shape: f32[2,18,18,4], index: 0, kind: input, shape index: {}]
  %s1 = inlined_call_operand.vmem [shape: f32[36,8], index: 1, kind: input, shape index: {}]
  %s2 = inlined_call_operand.vmem [shape: f32[1,8], index: 2, kind: input, shape index: {}]
  %s3 = inlined_call_operand.vmem [shape: f32[72,16], index: 3, kind: input, shape index: {}]
  %s4 = inlined_call_operand.vmem [shape: f32[1,16], index: 4, kind: input, shape index: {}]
  %s5 = inlined_call_operand.vmem [shape: f32[8,16], index: 5, kind: input, shape index: {}]
  %s6 = inlined_call_operand.vmem [shape: f32[16,16], index: 6, kind: input, shape index: {}]
  %s7 = inlined_call_operand.vmem [shape: f32[1,16], index: 7, kind: input, shape index: {}]
  %s8 = inlined_call_operand.vmem [shape: f32[16,3], index: 8, kind: input, shape index: {}]
  %s9 = inlined_call_operand.vmem [shape: f32[1,3], index: 9, kind: input, shape index: {}]
  %s10 = inlined_call_operand.vmem [shape: f32[16,3], index: 10, kind: input, shape index: {}]
  %s11 = inlined_call_operand.vmem [shape: f32[1,3], index: 11, kind: input, shape index: {}]
  %s12 = inlined_call_operand.vmem [shape: f32[2,64,128], index: 12, kind: output, shape index: {}]
  %s13 = sld [smem:[#allocation0]]
  $region81: #{segmenter_forward.1} parent=0
    _
  %s15 = ssub.s32 1, %s13
  %s16 = scalar_select 0, %s15, %s13
  loop: start=0, step=1, limit=4
  $region2: #{segmenter_forward.1} parent=0 // loop_pre_header
    _
  $region3: #{segmenter_forward.1} parent=0 // loop_header
    %s18 = sphi 0, %s22
    %p19 = scmp.ge.s32.totalorder %s18, 4
    %s28 = sphi 0, %s30
    %s31 = sphi 0, %s28
    %s32 = sphi 0, %s31
    %s48 = sphi 0, %s32
    %s52 = sphi 0, %s52
    %s54 = sphi 0, %s52
    %s55 = sphi 0, %s54
    %s69 = sphi 0, %s55
    %s73 = sphi 0, %s73
    %s75 = sphi 0, %s73
    %s76 = sphi 0, %s75
    %s90 = sphi 0, %s76
    %s94 = sphi 0, %s94
    %s96 = sphi 0, %s94
    %s97 = sphi 0, %s96
    %s111 = sphi 0, %s97
    %s115 = sphi 0, %s115
    %s117 = sphi 0, %s115
    %s118 = sphi 0, %s117
    %s132 = sphi 0, %s118
    %s136 = sphi 0, %s136
    %s138 = sphi 0, %s136
    %s139 = sphi 0, %s138
    %s153 = sphi 0, %s139
    %s157 = sphi 0, %s157
    %s159 = sphi 0, %s157
    %s160 = sphi 0, %s159
    %s174 = sphi 0, %s160
    %s178 = sphi 0, %s178
    %s180 = sphi 0, %s178
    %s181 = sphi 0, %s180
    %s195 = sphi 0, %s181
    %s199 = sphi 0, %s199
    %s201 = sphi 0, %s199
    %s202 = sphi 0, %s201
    %s216 = sphi 0, %s202
    %s220 = sphi 0, %s220
    %s222 = sphi 0, %s220
    %s223 = sphi 0, %s222
    %s237 = sphi 0, %s223
    %s241 = sphi 0, %s241
    %s243 = sphi 0, %s241
    %s244 = sphi 0, %s243
    %s258 = sphi 0, %s244
    %s262 = sphi 0, %s262
    %s264 = sphi 0, %s262
    %s265 = sphi 0, %s264
    %s279 = sphi 0, %s265
    %s285 = sphi 0, %s287
    %s288 = sphi 0, %s285
    %s289 = sphi 0, %s288
    %s305 = sphi 0, %s289
  $region4: #{segmenter_forward.1} parent=0 // loop_header_branch
    %21 = sbr.rel (%p19) target = $region8
  $region5: #{segmenter_forward.1} parent=0 // loop_body
    %s23 = ssub.s32 %s18, 1
    %s24 = ssub.s32 %s18, 2
    %s25 = sadd.s32 %s18, 1
    %s26 = ssub.s32 %s18, %s25
    %p27 = scmp.eq.s32.totalorder %s26, 0
    %s29 = sadd.s32 %s28, 1
    %s30 = scalar_select %p27, %s28, %s29
    %p33 = pneg %p27
    %p34 = scmp.eq.s32.totalorder %s18, 1
    %p35 = por %p33, %p34
    %p36 = scmp.ne.s32.totalorder %s28, %s31
    %p37 = scmp.eq.s32.totalorder %s18, 0
    %p38 = por %p36, %p37
    %p39 = scmp.ne.s32.totalorder %s28, %s31
    %p40 = scmp.eq.s32.totalorder %s23, 1
    %p41 = por %p39, %p40
    %p42 = scmp.ne.s32.totalorder %s31, %s32
    %p43 = scmp.eq.s32.totalorder %s23, 0
    %p44 = por %p42, %p43
    %p45 = scmp.ne.s32.totalorder %s31, %s32
    %p46 = scmp.eq.s32.totalorder %s24, 1
    %p47 = por %p45, %p46
    %p49 = scmp.ne.s32.totalorder %s32, %s48
    %p50 = scmp.eq.s32.totalorder %s24, 0
    %p51 = por %p49, %p50
    %s53 = sadd.s32 %s52, 1
    %p56 = scmp.eq.s32.totalorder %s18, 1
    %p57 = scmp.ne.s32.totalorder %s52, %s54
    %p58 = scmp.eq.s32.totalorder %s18, 0
    %p59 = por %p57, %p58
    %p60 = scmp.ne.s32.totalorder %s52, %s54
    %p61 = scmp.eq.s32.totalorder %s23, 1
    %p62 = por %p60, %p61
    %p63 = scmp.ne.s32.totalorder %s54, %s55
    %p64 = scmp.eq.s32.totalorder %s23, 0
    %p65 = por %p63, %p64
    %p66 = scmp.ne.s32.totalorder %s54, %s55
    %p67 = scmp.eq.s32.totalorder %s24, 1
    %p68 = por %p66, %p67
    %p70 = scmp.ne.s32.totalorder %s55, %s69
    %p71 = scmp.eq.s32.totalorder %s24, 0
    %p72 = por %p70, %p71
    %s74 = sadd.s32 %s73, 1
    %p77 = scmp.eq.s32.totalorder %s18, 1
    %p78 = scmp.ne.s32.totalorder %s73, %s75
    %p79 = scmp.eq.s32.totalorder %s18, 0
    %p80 = por %p78, %p79
    %p81 = scmp.ne.s32.totalorder %s73, %s75
    %p82 = scmp.eq.s32.totalorder %s23, 1
    %p83 = por %p81, %p82
    %p84 = scmp.ne.s32.totalorder %s75, %s76
    %p85 = scmp.eq.s32.totalorder %s23, 0
    %p86 = por %p84, %p85
    %p87 = scmp.ne.s32.totalorder %s75, %s76
    %p88 = scmp.eq.s32.totalorder %s24, 1
    %p89 = por %p87, %p88
    %p91 = scmp.ne.s32.totalorder %s76, %s90
    %p92 = scmp.eq.s32.totalorder %s24, 0
    %p93 = por %p91, %p92
    %s95 = sadd.s32 %s94, 1
    %p98 = scmp.eq.s32.totalorder %s18, 1
    %p99 = scmp.ne.s32.totalorder %s94, %s96
    %p100 = scmp.eq.s32.totalorder %s18, 0
    %p101 = por %p99, %p100
    %p102 = scmp.ne.s32.totalorder %s94, %s96
    %p103 = scmp.eq.s32.totalorder %s23, 1
    %p104 = por %p102, %p103
    %p105 = scmp.ne.s32.totalorder %s96, %s97
    %p106 = scmp.eq.s32.totalorder %s23, 0
    %p107 = por %p105, %p106
    %p108 = scmp.ne.s32.totalorder %s96, %s97
    %p109 = scmp.eq.s32.totalorder %s24, 1
    %p110 = por %p108, %p109
    %p112 = scmp.ne.s32.totalorder %s97, %s111
    %p113 = scmp.eq.s32.totalorder %s24, 0
    %p114 = por %p112, %p113
    %s116 = sadd.s32 %s115, 1
    %p119 = scmp.eq.s32.totalorder %s18, 1
    %p120 = scmp.ne.s32.totalorder %s115, %s117
    %p121 = scmp.eq.s32.totalorder %s18, 0
    %p122 = por %p120, %p121
    %p123 = scmp.ne.s32.totalorder %s115, %s117
    %p124 = scmp.eq.s32.totalorder %s23, 1
    %p125 = por %p123, %p124
    %p126 = scmp.ne.s32.totalorder %s117, %s118
    %p127 = scmp.eq.s32.totalorder %s23, 0
    %p128 = por %p126, %p127
    %p129 = scmp.ne.s32.totalorder %s117, %s118
    %p130 = scmp.eq.s32.totalorder %s24, 1
    %p131 = por %p129, %p130
    %p133 = scmp.ne.s32.totalorder %s118, %s132
    %p134 = scmp.eq.s32.totalorder %s24, 0
    %p135 = por %p133, %p134
    %s137 = sadd.s32 %s136, 1
    %p140 = scmp.eq.s32.totalorder %s18, 1
    %p141 = scmp.ne.s32.totalorder %s136, %s138
    %p142 = scmp.eq.s32.totalorder %s18, 0
    %p143 = por %p141, %p142
    %p144 = scmp.ne.s32.totalorder %s136, %s138
    %p145 = scmp.eq.s32.totalorder %s23, 1
    %p146 = por %p144, %p145
    %p147 = scmp.ne.s32.totalorder %s138, %s139
    %p148 = scmp.eq.s32.totalorder %s23, 0
    %p149 = por %p147, %p148
    %p150 = scmp.ne.s32.totalorder %s138, %s139
    %p151 = scmp.eq.s32.totalorder %s24, 1
    %p152 = por %p150, %p151
    %p154 = scmp.ne.s32.totalorder %s139, %s153
    %p155 = scmp.eq.s32.totalorder %s24, 0
    %p156 = por %p154, %p155
    %s158 = sadd.s32 %s157, 1
    %p161 = scmp.eq.s32.totalorder %s18, 1
    %p162 = scmp.ne.s32.totalorder %s157, %s159
    %p163 = scmp.eq.s32.totalorder %s18, 0
    %p164 = por %p162, %p163
    %p165 = scmp.ne.s32.totalorder %s157, %s159
    %p166 = scmp.eq.s32.totalorder %s23, 1
    %p167 = por %p165, %p166
    %p168 = scmp.ne.s32.totalorder %s159, %s160
    %p169 = scmp.eq.s32.totalorder %s23, 0
    %p170 = por %p168, %p169
    %p171 = scmp.ne.s32.totalorder %s159, %s160
    %p172 = scmp.eq.s32.totalorder %s24, 1
    %p173 = por %p171, %p172
    %p175 = scmp.ne.s32.totalorder %s160, %s174
    %p176 = scmp.eq.s32.totalorder %s24, 0
    %p177 = por %p175, %p176
    %s179 = sadd.s32 %s178, 1
    %p182 = scmp.eq.s32.totalorder %s18, 1
    %p183 = scmp.ne.s32.totalorder %s178, %s180
    %p184 = scmp.eq.s32.totalorder %s18, 0
    %p185 = por %p183, %p184
    %p186 = scmp.ne.s32.totalorder %s178, %s180
    %p187 = scmp.eq.s32.totalorder %s23, 1
    %p188 = por %p186, %p187
    %p189 = scmp.ne.s32.totalorder %s180, %s181
    %p190 = scmp.eq.s32.totalorder %s23, 0
    %p191 = por %p189, %p190
    %p192 = scmp.ne.s32.totalorder %s180, %s181
    %p193 = scmp.eq.s32.totalorder %s24, 1
    %p194 = por %p192, %p193
    %p196 = scmp.ne.s32.totalorder %s181, %s195
    %p197 = scmp.eq.s32.totalorder %s24, 0
    %p198 = por %p196, %p197
    %s200 = sadd.s32 %s199, 1
    %p203 = scmp.eq.s32.totalorder %s18, 1
    %p204 = scmp.ne.s32.totalorder %s199, %s201
    %p205 = scmp.eq.s32.totalorder %s18, 0
    %p206 = por %p204, %p205
    %p207 = scmp.ne.s32.totalorder %s199, %s201
    %p208 = scmp.eq.s32.totalorder %s23, 1
    %p209 = por %p207, %p208
    %p210 = scmp.ne.s32.totalorder %s201, %s202
    %p211 = scmp.eq.s32.totalorder %s23, 0
    %p212 = por %p210, %p211
    %p213 = scmp.ne.s32.totalorder %s201, %s202
    %p214 = scmp.eq.s32.totalorder %s24, 1
    %p215 = por %p213, %p214
    %p217 = scmp.ne.s32.totalorder %s202, %s216
    %p218 = scmp.eq.s32.totalorder %s24, 0
    %p219 = por %p217, %p218
    %s221 = sadd.s32 %s220, 1
    %p224 = scmp.eq.s32.totalorder %s18, 1
    %p225 = scmp.ne.s32.totalorder %s220, %s222
    %p226 = scmp.eq.s32.totalorder %s18, 0
    %p227 = por %p225, %p226
    %p228 = scmp.ne.s32.totalorder %s220, %s222
    %p229 = scmp.eq.s32.totalorder %s23, 1
    %p230 = por %p228, %p229
    %p231 = scmp.ne.s32.totalorder %s222, %s223
    %p232 = scmp.eq.s32.totalorder %s23, 0
    %p233 = por %p231, %p232
    %p234 = scmp.ne.s32.totalorder %s222, %s223
    %p235 = scmp.eq.s32.totalorder %s24, 1
    %p236 = por %p234, %p235
    %p238 = scmp.ne.s32.totalorder %s223, %s237
    %p239 = scmp.eq.s32.totalorder %s24, 0
    %p240 = por %p238, %p239
    %s242 = sadd.s32 %s241, 1
    %p245 = scmp.eq.s32.totalorder %s18, 1
    %p246 = scmp.ne.s32.totalorder %s241, %s243
    %p247 = scmp.eq.s32.totalorder %s18, 0
    %p248 = por %p246, %p247
    %p249 = scmp.ne.s32.totalorder %s241, %s243
    %p250 = scmp.eq.s32.totalorder %s23, 1
    %p251 = por %p249, %p250
    %p252 = scmp.ne.s32.totalorder %s243, %s244
    %p253 = scmp.eq.s32.totalorder %s23, 0
    %p254 = por %p252, %p253
    %p255 = scmp.ne.s32.totalorder %s243, %s244
    %p256 = scmp.eq.s32.totalorder %s24, 1
    %p257 = por %p255, %p256
    %p259 = scmp.ne.s32.totalorder %s244, %s258
    %p260 = scmp.eq.s32.totalorder %s24, 0
    %p261 = por %p259, %p260
    %s263 = sadd.s32 %s262, 1
    %p266 = scmp.eq.s32.totalorder %s18, 1
    %p267 = scmp.ne.s32.totalorder %s262, %s264
    %p268 = scmp.eq.s32.totalorder %s18, 0
    %p269 = por %p267, %p268
    %p270 = scmp.ne.s32.totalorder %s262, %s264
    %p271 = scmp.eq.s32.totalorder %s23, 1
    %p272 = por %p270, %p271
    %p273 = scmp.ne.s32.totalorder %s264, %s265
    %p274 = scmp.eq.s32.totalorder %s23, 0
    %p275 = por %p273, %p274
    %p276 = scmp.ne.s32.totalorder %s264, %s265
    %p277 = scmp.eq.s32.totalorder %s24, 1
    %p278 = por %p276, %p277
    %p280 = scmp.ne.s32.totalorder %s265, %s279
    %p281 = scmp.eq.s32.totalorder %s24, 0
    %p282 = por %p280, %p281
    %s283 = ssub.s32 %s18, %s25
    %p284 = scmp.eq.s32.totalorder %s283, 0
    %s286 = sadd.s32 %s285, 1
    %s287 = scalar_select %p284, %s285, %s286
    %p290 = pneg %p284
    %p291 = scmp.eq.s32.totalorder %s18, 1
    %p292 = por %p290, %p291
    %p293 = scmp.ne.s32.totalorder %s285, %s288
    %p294 = scmp.eq.s32.totalorder %s18, 0
    %p295 = por %p293, %p294
    %p296 = scmp.ne.s32.totalorder %s285, %s288
    %p297 = scmp.eq.s32.totalorder %s23, 1
    %p298 = por %p296, %p297
    %p299 = scmp.ne.s32.totalorder %s288, %s289
    %p300 = scmp.eq.s32.totalorder %s23, 0
    %p301 = por %p299, %p300
    %p302 = scmp.ne.s32.totalorder %s288, %s289
    %p303 = scmp.eq.s32.totalorder %s24, 1
    %p304 = por %p302, %p303
    %p306 = scmp.ne.s32.totalorder %s289, %s305
    %p307 = scmp.eq.s32.totalorder %s24, 0
    %p308 = por %p306, %p307
    %p309 = scmp.le.s32.totalorder 1, %s18
    %p310 = scmp.lt.s32.totalorder %s18, 3
    %p311 = pnand %p309, %p310
    %p312 = pneg %p311
    // Predicated region
    $region9: #{segmenter_forward.1} parent=5 // pred_check
      _
    $region10: #{segmenter_forward.1} parent=5 // pred_check_branch
      %314 = sbr.rel (%p311) target = $region12
    $region11: #{segmenter_forward.1} parent=5 // pred_region
      %s315 = ssub.s32 %s18, 1
      // Predicated region
      $region13: #{segmenter_forward.1} parent=11 // pred_check
        %p316 = pneg %p65
      $region14: #{segmenter_forward.1} parent=11 // pred_check_branch
        %318 = sbr.rel (%p316) target = $region16
      $region15: #{segmenter_forward.1} parent=11 // pred_region
        _
      $region16: #{segmenter_forward.1} parent=11 // pred_fallthru
        _
      // Predicated region
      $region17: #{segmenter_forward.1} parent=11 // pred_check
        %p319 = pneg %p86
      $region18: #{segmenter_forward.1} parent=11 // pred_check_branch
        %321 = sbr.rel (%p319) target = $region20
      $region19: #{segmenter_forward.1} parent=11 // pred_region
        _
      $region20: #{segmenter_forward.1} parent=11 // pred_fallthru
        _
      // Predicated region
      $region21: #{segmenter_forward.1} parent=11 // pred_check
        %p322 = pneg %p107
      $region22: #{segmenter_forward.1} parent=11 // pred_check_branch
        %324 = sbr.rel (%p322) target = $region24
      $region23: #{segmenter_forward.1} parent=11 // pred_region
        _
      $region24: #{segmenter_forward.1} parent=11 // pred_fallthru
        _
      // Predicated region
      $region25: #{segmenter_forward.1} parent=11 // pred_check
        %p325 = pneg %p128
      $region26: #{segmenter_forward.1} parent=11 // pred_check_branch
        %327 = sbr.rel (%p325) target = $region28
      $region27: #{segmenter_forward.1} parent=11 // pred_region
        _
      $region28: #{segmenter_forward.1} parent=11 // pred_fallthru
        _
      // Predicated region
      $region29: #{segmenter_forward.1} parent=11 // pred_check
        %p328 = pneg %p149
      $region30: #{segmenter_forward.1} parent=11 // pred_check_branch
        %330 = sbr.rel (%p328) target = $region32
      $region31: #{segmenter_forward.1} parent=11 // pred_region
        _
      $region32: #{segmenter_forward.1} parent=11 // pred_fallthru
        _
      // Predicated region
      $region33: #{segmenter_forward.1} parent=11 // pred_check
        %p331 = pneg %p170
      $region34: #{segmenter_forward.1} parent=11 // pred_check_branch
        %333 = sbr.rel (%p331) target = $region36
      $region35: #{segmenter_forward.1} parent=11 // pred_region
        _
      $region36: #{segmenter_forward.1} parent=11 // pred_fallthru
        _
      // Predicated region
      $region37: #{segmenter_forward.1} parent=11 // pred_check
        %p334 = pneg %p191
      $region38: #{segmenter_forward.1} parent=11 // pred_check_branch
        %336 = sbr.rel (%p334) target = $region40
      $region39: #{segmenter_forward.1} parent=11 // pred_region
        _
      $region40: #{segmenter_forward.1} parent=11 // pred_fallthru
        _
      // Predicated region
      $region41: #{segmenter_forward.1} parent=11 // pred_check
        %p337 = pneg %p212
      $region42: #{segmenter_forward.1} parent=11 // pred_check_branch
        %339 = sbr.rel (%p337) target = $region44
      $region43: #{segmenter_forward.1} parent=11 // pred_region
        _
      $region44: #{segmenter_forward.1} parent=11 // pred_fallthru
        _
      // Predicated region
      $region45: #{segmenter_forward.1} parent=11 // pred_check
        %p340 = pneg %p233
      $region46: #{segmenter_forward.1} parent=11 // pred_check_branch
        %342 = sbr.rel (%p340) target = $region48
      $region47: #{segmenter_forward.1} parent=11 // pred_region
        _
      $region48: #{segmenter_forward.1} parent=11 // pred_fallthru
        _
      // Predicated region
      $region49: #{segmenter_forward.1} parent=11 // pred_check
        %p343 = pneg %p254
      $region50: #{segmenter_forward.1} parent=11 // pred_check_branch
        %345 = sbr.rel (%p343) target = $region52
      $region51: #{segmenter_forward.1} parent=11 // pred_region
        _
      $region52: #{segmenter_forward.1} parent=11 // pred_fallthru
        _
      // Predicated region
      $region53: #{segmenter_forward.1} parent=11 // pred_check
        %p346 = pneg %p275
      $region54: #{segmenter_forward.1} parent=11 // pred_check_branch
        %348 = sbr.rel (%p346) target = $region56
      $region55: #{segmenter_forward.1} parent=11 // pred_region
        _
      $region56: #{segmenter_forward.1} parent=11 // pred_fallthru
        _
    $region12: #{segmenter_forward.1} parent=5 // pred_fallthru
      _
    %p349 = scmp.lt.s32.totalorder %s18, 2
    // Predicated region
    $region57: #{segmenter_forward.1} parent=5 // pred_check
      %p350 = pneg %p349
    $region58: #{segmenter_forward.1} parent=5 // pred_check_branch
      %352 = sbr.rel (%p350) target = $region60
    $region59: #{segmenter_forward.1} parent=5 // pred_region
      // Predicated region
      $region61: #{segmenter_forward.1} parent=59 // pred_check
        %p353 = pneg %p38
      $region62: #{segmenter_forward.1} parent=59 // pred_check_branch
        %355 = sbr.rel (%p353) target = $region64
      $region63: #{segmenter_forward.1} parent=59 // pred_region
        %p356 = scmp.lt.s32.totalorder %s18, 1
        %s357 = scalar_select %p356, %s18, 1
        %s358 = smul.addr %s357, 54
        %s359 = smul.addr %s358, 8
        %s360 = scalar_lea.vmem %s0, %s359
      $region64: #{segmenter_forward.1} parent=59 // pred_fallthru
        _
    $region60: #{segmenter_forward.1} parent=5 // pred_fallthru
      _
    %p361 = scmp.le.s32.totalorder 1, %s18
    %p362 = scmp.lt.s32.totalorder %s18, 3
    %p363 = pnand %p361, %p362
    %p364 = pneg %p363
    // Predicated region
    $region65: #{segmenter_forward.1} parent=5 // pred_check
      _
    $region66: #{segmenter_forward.1} parent=5 // pred_check_branch
      %366 = sbr.rel (%p363) target = $region68
    $region67: #{segmenter_forward.1} parent=5 // pred_region
      %s367 = ssub.s32 %s18, 1
      %p368 = scmp.lt.s32.totalorder %s23, 1
      %s369 = scalar_select %p368, %s23, 1
      %s370 = smul.addr %s369, 54
      %s371 = smul.addr %s370, 8
      %s372 = scalar_lea.vmem %s0, %s371
      %p373 = pneg %p44
      %p374 = pneg %p41
      %p375 = pneg %p65
      %p376 = pneg %p62
      %p377 = pneg %p86
      %p378 = pneg %p83
      %p379 = pneg %p107
      %p380 = pneg %p104
      %p381 = pneg %p128
      %p382 = pneg %p125
      %p383 = pneg %p149
      %p384 = pneg %p146
      %p385 = pneg %p170
      %p386 = pneg %p167
      %p387 = pneg %p191
      %p388 = pneg %p188
      %p389 = pneg %p212
      %p390 = pneg %p209
      %p391 = pneg %p233
      %p392 = pneg %p230
      %p393 = pneg %p254
      %p394 = pneg %p251
      %p395 = pneg %p275
      %p396 = pneg %p272
      %p397 = pneg %p301
      %p398 = pneg %p298
      %p399 = scmp.lt.s32.totalorder %s23, 1
      %s400 = scalar_select %p399, %s23, 1
      %s401 = smul.addr %s400, 8
      %s402 = smul.addr %s401, 8
      %s403 = scalar_lea.vmem %s12, %s402
      %p404 = scmp.lt.s32.totalorder %s23, 1
      %s405 = scalar_select %p404, %s23, 1
      %s406 = smul.addr %s405, 54
      %s407 = smul.addr %s406, 8
      %s408 = scalar_lea.vmem %s0, %s407
      %p409 = scmp.lt.s32.totalorder %s23, 1
      %s410 = scalar_select %p409, %s23, 1
      %s411 = smul.addr %s410, 8
      %s412 = smul.addr %s411, 8
      %s413 = scalar_lea.vmem %s12, %s412
      %v414 = vld [vmem:[%s408] ss:$2 sm:$0xff]
      %s415 = scalar_lea.vmem %s408, 48
      %v416 = vld [vmem:[%s415] ss:$2 sm:$0xff]
      %s417 = scalar_lea.vmem %s408, 96
      %v418 = vld [vmem:[%s417] ss:$2 sm:$0xff]
      %s419 = scalar_lea.vmem %s408, 144
      %v420 = vld [vmem:[%s419] ss:$2 sm:$0xff]
      %s421 = scalar_lea.vmem %s408, 192
      %v422 = vld [vmem:[%s421] ss:$2 sm:$0xff]
      %s423 = scalar_lea.vmem %s408, 240
      %v424 = vld [vmem:[%s423] ss:$2 sm:$0xff]
      %s425 = scalar_lea.vmem %s408, 288
      %v426 = vld [vmem:[%s425] ss:$2 sm:$0xff]
      %s427 = scalar_lea.vmem %s408, 336
      %v428 = vld [vmem:[%s427] ss:$2 sm:$0xff]
      %s429 = scalar_lea.vmem %s408, 1
      %v430 = vld [vmem:[%s429] ss:$2 sm:$0xff]
      %s431 = scalar_lea.vmem %s408, 49
      %v432 = vld [vmem:[%s431] ss:$2 sm:$0xff]
      %s433 = scalar_lea.vmem %s408, 97
      %v434 = vld [vmem:[%s433] ss:$2 sm:$0xff]
      %s435 = scalar_lea.vmem %s408, 145
      %v436 = vld [vmem:[%s435] ss:$2 sm:$0xff]
      %s437 = scalar_lea.vmem %s408, 193
      %v438 = vld [vmem:[%s437] ss:$2 sm:$0xff]
      %s439 = scalar_lea.vmem %s408, 241
      %v440 = vld [vmem:[%s439] ss:$2 sm:$0xff]
      %s441 = scalar_lea.vmem %s408, 289
      %v442 = vld [vmem:[%s441] ss:$2 sm:$0xff]
      %s443 = scalar_lea.vmem %s408, 337
      %v444 = vld [vmem:[%s443] ss:$2 sm:$0xff]
      %s445 = scalar_lea.vmem %s408, 2
      %v446 = vld [vmem:[%s445] ss:$2 sm:$0xff]
      %s447 = scalar_lea.vmem %s408, 50
      %v448 = vld [vmem:[%s447] ss:$2 sm:$0xff]
      %s449 = scalar_lea.vmem %s408, 98
      %v450 = vld [vmem:[%s449] ss:$2 sm:$0xff]
      %s451 = scalar_lea.vmem %s408, 146
      %v452 = vld [vmem:[%s451] ss:$2 sm:$0xff]
      %s453 = scalar_lea.vmem %s408, 194
      %v454 = vld [vmem:[%s453] ss:$2 sm:$0xff]
      %s455 = scalar_lea.vmem %s408, 242
      %v456 = vld [vmem:[%s455] ss:$2 sm:$0xff]
      %s457 = scalar_lea.vmem %s408, 290
      %v458 = vld [vmem:[%s457] ss:$2 sm:$0xff]
      %s459 = scalar_lea.vmem %s408, 338
      %v460 = vld [vmem:[%s459] ss:$2 sm:$0xff]
      %s461 = scalar_lea.vmem %s408, 24
      %v462 = vld [vmem:[%s461] ss:$2 sm:$0xff]
      %s463 = scalar_lea.vmem %s461, 48
      %v464 = vld [vmem:[%s463] ss:$2 sm:$0xff]
      %s465 = scalar_lea.vmem %s461, 96
      %v466 = vld [vmem:[%s465] ss:$2 sm:$0xff]
      %s467 = scalar_lea.vmem %s461, 144
      %v468 = vld [vmem:[%s467] ss:$2 sm:$0xff]
      %s469 = scalar_lea.vmem %s461, 192
      %v470 = vld [vmem:[%s469] ss:$2 sm:$0xff]
      %s471 = scalar_lea.vmem %s461, 240
      %v472 = vld [vmem:[%s471] ss:$2 sm:$0xff]
      %s473 = scalar_lea.vmem %s461, 288
      %v474 = vld [vmem:[%s473] ss:$2 sm:$0xff]
      %s475 = scalar_lea.vmem %s461, 336
      %v476 = vld [vmem:[%s475] ss:$2 sm:$0xff]
      %s477 = scalar_lea.vmem %s461, 1
      %v478 = vld [vmem:[%s477] ss:$2 sm:$0xff]
      %s479 = scalar_lea.vmem %s461, 49
      %v480 = vld [vmem:[%s479] ss:$2 sm:$0xff]
      %s481 = scalar_lea.vmem %s461, 97
      %v482 = vld [vmem:[%s481] ss:$2 sm:$0xff]
      %s483 = scalar_lea.vmem %s461, 145
      %v484 = vld [vmem:[%s483] ss:$2 sm:$0xff]
      %s485 = scalar_lea.vmem %s461, 193
      %v486 = vld [vmem:[%s485] ss:$2 sm:$0xff]
      %s487 = scalar_lea.vmem %s461, 241
      %v488 = vld [vmem:[%s487] ss:$2 sm:$0xff]
      %s489 = scalar_lea.vmem %s461, 289
      %v490 = vld [vmem:[%s489] ss:$2 sm:$0xff]
      %s491 = scalar_lea.vmem %s461, 337
      %v492 = vld [vmem:[%s491] ss:$2 sm:$0xff]
      %s493 = scalar_lea.vmem %s461, 2
      %v494 = vld [vmem:[%s493] ss:$2 sm:$0xff]
      %s495 = scalar_lea.vmem %s461, 50
      %v496 = vld [vmem:[%s495] ss:$2 sm:$0xff]
      %s497 = scalar_lea.vmem %s461, 98
      %v498 = vld [vmem:[%s497] ss:$2 sm:$0xff]
      %s499 = scalar_lea.vmem %s461, 146
      %v500 = vld [vmem:[%s499] ss:$2 sm:$0xff]
      %s501 = scalar_lea.vmem %s461, 194
      %v502 = vld [vmem:[%s501] ss:$2 sm:$0xff]
      %s503 = scalar_lea.vmem %s461, 242
      %v504 = vld [vmem:[%s503] ss:$2 sm:$0xff]
      %s505 = scalar_lea.vmem %s461, 290
      %v506 = vld [vmem:[%s505] ss:$2 sm:$0xff]
      %s507 = scalar_lea.vmem %s461, 338
      %v508 = vld [vmem:[%s507] ss:$2 sm:$0xff]
      %s509 = scalar_lea.vmem %s408, 48
      %v510 = vld [vmem:[%s509] ss:$2 sm:$0xff]
      %s511 = scalar_lea.vmem %s509, 48
      %v512 = vld [vmem:[%s511] ss:$2 sm:$0xff]
      %s513 = scalar_lea.vmem %s509, 96
      %v514 = vld [vmem:[%s513] ss:$2 sm:$0xff]
      %s515 = scalar_lea.vmem %s509, 144
      %v516 = vld [vmem:[%s515] ss:$2 sm:$0xff]
      %s517 = scalar_lea.vmem %s509, 192
      %v518 = vld [vmem:[%s517] ss:$2 sm:$0xff]
      %s519 = scalar_lea.vmem %s509, 240
      %v520 = vld [vmem:[%s519] ss:$2 sm:$0xff]
      %s521 = scalar_lea.vmem %s509, 288
      %v522 = vld [vmem:[%s521] ss:$2 sm:$0xff]
      %s523 = scalar_lea.vmem %s509, 336
      %v524 = vld [vmem:[%s523] ss:$2 sm:$0xff]
      %s525 = scalar_lea.vmem %s509, 1
      %v526 = vld [vmem:[%s525] ss:$2 sm:$0xff]
      %s527 = scalar_lea.vmem %s509, 49
      %v528 = vld [vmem:[%s527] ss:$2 sm:$0xff]
      %s529 = scalar_lea.vmem %s509, 97
      %v530 = vld [vmem:[%s529] ss:$2 sm:$0xff]
      %s531 = scalar_lea.vmem %s509, 145
      %v532 = vld [vmem:[%s531] ss:$2 sm:$0xff]
      %s533 = scalar_lea.vmem %s509, 193
      %v534 = vld [vmem:[%s533] ss:$2 sm:$0xff]
      %s535 = scalar_lea.vmem %s509, 241
      %v536 = vld [vmem:[%s535] ss:$2 sm:$0xff]
      %s537 = scalar_lea.vmem %s509, 289
      %v538 = vld [vmem:[%s537] ss:$2 sm:$0xff]
      %s539 = scalar_lea.vmem %s509, 337
      %v540 = vld [vmem:[%s539] ss:$2 sm:$0xff]
      %s541 = scalar_lea.vmem %s509, 2
      %v542 = vld [vmem:[%s541] ss:$2 sm:$0xff]
      %s543 = scalar_lea.vmem %s509, 50
      %v544 = vld [vmem:[%s543] ss:$2 sm:$0xff]
      %s545 = scalar_lea.vmem %s509, 98
      %v546 = vld [vmem:[%s545] ss:$2 sm:$0xff]
      %s547 = scalar_lea.vmem %s509, 146
      %v548 = vld [vmem:[%s547] ss:$2 sm:$0xff]
      %s549 = scalar_lea.vmem %s509, 194
      %v550 = vld [vmem:[%s549] ss:$2 sm:$0xff]
      %s551 = scalar_lea.vmem %s509, 242
      %v552 = vld [vmem:[%s551] ss:$2 sm:$0xff]
      %s553 = scalar_lea.vmem %s509, 290
      %v554 = vld [vmem:[%s553] ss:$2 sm:$0xff]
      %s555 = scalar_lea.vmem %s509, 338
      %v556 = vld [vmem:[%s555] ss:$2 sm:$0xff]
      %565 = vrot.lane.b32.xlu0 %v430, 4
      %v566 = vpop.permute.xlu0 %565
      %567 = vrot.lane.b32.xlu0 %v432, 4
      %v568 = vpop.permute.xlu0 %567
      %569 = vrot.lane.b32.xlu0 %v434, 4
      %v570 = vpop.permute.xlu0 %569
      %571 = vrot.lane.b32.xlu0 %v436, 4
      %v572 = vpop.permute.xlu0 %571
      %573 = vrot.lane.b32.xlu0 %v438, 4
      %v574 = vpop.permute.xlu0 %573
      %575 = vrot.lane.b32.xlu0 %v440, 4
      %v576 = vpop.permute.xlu0 %575
      %577 = vrot.lane.b32.xlu0 %v442, 4
      %v578 = vpop.permute.xlu0 %577
      %579 = vrot.lane.b32.xlu0 %v444, 4
      %v580 = vpop.permute.xlu0 %579
      %597 = vrot.lane.b32.xlu0 %v446, 8
      %v598 = vpop.permute.xlu0 %597
      %599 = vrot.lane.b32.xlu0 %v448, 8
      %v600 = vpop.permute.xlu0 %599
      %601 = vrot.lane.b32.xlu0 %v450, 8
      %v602 = vpop.permute.xlu0 %601
      %603 = vrot.lane.b32.xlu0 %v452, 8
      %v604 = vpop.permute.xlu0 %603
      %605 = vrot.lane.b32.xlu0 %v454, 8
      %v606 = vpop.permute.xlu0 %605
      %607 = vrot.lane.b32.xlu0 %v456, 8
      %v608 = vpop.permute.xlu0 %607
      %609 = vrot.lane.b32.xlu0 %v458, 8
      %v610 = vpop.permute.xlu0 %609
      %611 = vrot.lane.b32.xlu0 %v460, 8
      %v612 = vpop.permute.xlu0 %611
      %629 = vrot.lane.b32.xlu0 %v462, 12
      %v630 = vpop.permute.xlu0 %629
      %631 = vrot.lane.b32.xlu0 %v464, 12
      %v632 = vpop.permute.xlu0 %631
      %633 = vrot.lane.b32.xlu0 %v466, 12
      %v634 = vpop.permute.xlu0 %633
      %635 = vrot.lane.b32.xlu0 %v468, 12
      %v636 = vpop.permute.xlu0 %635
      %637 = vrot.lane.b32.xlu0 %v470, 12
      %v638 = vpop.permute.xlu0 %637
      %639 = vrot.lane.b32.xlu0 %v472, 12
      %v640 = vpop.permute.xlu0 %639
      %641 = vrot.lane.b32.xlu0 %v474, 12
      %v642 = vpop.permute.xlu0 %641
      %643 = vrot.lane.b32.xlu0 %v476, 12
      %v644 = vpop.permute.xlu0 %643
      %661 = vrot.lane.b32.xlu0 %v478, 16
      %v662 = vpop.permute.xlu0 %661
      %663 = vrot.lane.b32.xlu0 %v480, 16
      %v664 = vpop.permute.xlu0 %663
      %665 = vrot.lane.b32.xlu0 %v482, 16
      %v666 = vpop.permute.xlu0 %665
      %667 = vrot.lane.b32.xlu0 %v484, 16
      %v668 = vpop.permute.xlu0 %667
      %669 = vrot.lane.b32.xlu0 %v486, 16
      %v670 = vpop.permute.xlu0 %669
      %671 = vrot.lane.b32.xlu0 %v488, 16
      %v672 = vpop.permute.xlu0 %671
      %673 = vrot.lane.b32.xlu0 %v490, 16
      %v674 = vpop.permute.xlu0 %673
      %675 = vrot.lane.b32.xlu0 %v492, 16
      %v676 = vpop.permute.xlu0 %675
      %693 = vrot.lane.b32.xlu0 %v494, 20
      %v694 = vpop.permute.xlu0 %693
      %695 = vrot.lane.b32.xlu0 %v496, 20
      %v696 = vpop.permute.xlu0 %695
      %697 = vrot.lane.b32.xlu0 %v498, 20
      %v698 = vpop.permute.xlu0 %697
      %699 = vrot.lane.b32.xlu0 %v500, 20
      %v700 = vpop.permute.xlu0 %699
      %701 = vrot.lane.b32.xlu0 %v502, 20
      %v702 = vpop.permute.xlu0 %701
      %703 = vrot.lane.b32.xlu0 %v504, 20
      %v704 = vpop.permute.xlu0 %703
      %705 = vrot.lane.b32.xlu0 %v506, 20
      %v706 = vpop.permute.xlu0 %705
      %707 = vrot.lane.b32.xlu0 %v508, 20
      %v708 = vpop.permute.xlu0 %707
      %725 = vrot.lane.b32.xlu0 %v510, 24
      %v726 = vpop.permute.xlu0 %725
      %727 = vrot.lane.b32.xlu0 %v512, 24
      %v728 = vpop.permute.xlu0 %727
      %729 = vrot.lane.b32.xlu0 %v514, 24
      %v730 = vpop.permute.xlu0 %729
      %731 = vrot.lane.b32.xlu0 %v516, 24
      %v732 = vpop.permute.xlu0 %731
      %733 = vrot.lane.b32.xlu0 %v518, 24
      %v734 = vpop.permute.xlu0 %733
      %735 = vrot.lane.b32.xlu0 %v520, 24
      %v736 = vpop.permute.xlu0 %735
      %737 = vrot.lane.b32.xlu0 %v522, 24
      %v738 = vpop.permute.xlu0 %737
      %739 = vrot.lane.b32.xlu0 %v524, 24
      %v740 = vpop.permute.xlu0 %739
      %757 = vrot.lane.b32.xlu0 %v526, 28
      %v758 = vpop.permute.xlu0 %757
      %759 = vrot.lane.b32.xlu0 %v528, 28
      %v760 = vpop.permute.xlu0 %759
      %761 = vrot.lane.b32.xlu0 %v530, 28
      %v762 = vpop.permute.xlu0 %761
      %763 = vrot.lane.b32.xlu0 %v532, 28
      %v764 = vpop.permute.xlu0 %763
      %765 = vrot.lane.b32.xlu0 %v534, 28
      %v766 = vpop.permute.xlu0 %765
      %767 = vrot.lane.b32.xlu0 %v536, 28
      %v768 = vpop.permute.xlu0 %767
      %769 = vrot.lane.b32.xlu0 %v538, 28
      %v770 = vpop.permute.xlu0 %769
      %771 = vrot.lane.b32.xlu0 %v540, 28
      %v772 = vpop.permute.xlu0 %771
      %789 = vrot.lane.b32.xlu0 %v542, 32
      %v790 = vpop.permute.xlu0 %789
      %791 = vrot.lane.b32.xlu0 %v544, 32
      %v792 = vpop.permute.xlu0 %791
      %793 = vrot.lane.b32.xlu0 %v546, 32
      %v794 = vpop.permute.xlu0 %793
      %795 = vrot.lane.b32.xlu0 %v548, 32
      %v796 = vpop.permute.xlu0 %795
      %797 = vrot.lane.b32.xlu0 %v550, 32
      %v798 = vpop.permute.xlu0 %797
      %799 = vrot.lane.b32.xlu0 %v552, 32
      %v800 = vpop.permute.xlu0 %799
      %801 = vrot.lane.b32.xlu0 %v554, 32
      %v802 = vpop.permute.xlu0 %801
      %803 = vrot.lane.b32.xlu0 %v556, 32
      %v804 = vpop.permute.xlu0 %803
      %vm813 = vcmask 31744
      %v814 = vsel %vm813, %v414, %v566
      %v815 = vsel %vm813, %v416, %v568
      %v816 = vsel %vm813, %v418, %v570
      %v817 = vsel %vm813, %v420, %v572
      %v818 = vsel %vm813, %v422, %v574
      %v819 = vsel %vm813, %v424, %v576
      %v820 = vsel %vm813, %v426, %v578
      %v821 = vsel %vm813, %v428, %v580
      %vm822 = vcmask 64512
      %v823 = vsel %vm822, %v814, %v598
      %v824 = vsel %vm822, %v815, %v600
      %v825 = vsel %vm822, %v816, %v602
      %v826 = vsel %vm822, %v817, %v604
      %v827 = vsel %vm822, %v818, %v606
      %v828 = vsel %vm822, %v819, %v608
      %v829 = vsel %vm822, %v820, %v610
      %v830 = vsel %vm822, %v821, %v612
      %vm831 = vcmask 97280
      %v832 = vsel %vm831, %v823, %v630
      %v833 = vsel %vm831, %v824, %v632
      %v834 = vsel %vm831, %v825, %v634
      %v835 = vsel %vm831, %v826, %v636
      %v836 = vsel %vm831, %v827, %v638
      %v837 = vsel %vm831, %v828, %v640
      %v838 = vsel %vm831, %v829, %v642
      %v839 = vsel %vm831, %v830, %v644
      %vm840 = vcmask 130048
      %v841 = vsel %vm840, %v832, %v662
      %v842 = vsel %vm840, %v833, %v664
      %v843 = vsel %vm840, %v834, %v666
      %v844 = vsel %vm840, %v835, %v668
      %v845 = vsel %vm840, %v836, %v670
      %v846 = vsel %vm840, %v837, %v672
      %v847 = vsel %vm840, %v838, %v674
      %v848 = vsel %vm840, %v839, %v676
      %vm849 = vcmask 162816
      %v850 = vsel %vm849, %v841, %v694
      %v851 = vsel %vm849, %v842, %v696
      %v852 = vsel %vm849, %v843, %v698
      %v853 = vsel %vm849, %v844, %v700
      %v854 = vsel %vm849, %v845, %v702
      %v855 = vsel %vm849, %v846, %v704
      %v856 = vsel %vm849, %v847, %v706
      %v857 = vsel %vm849, %v848, %v708
      %vm858 = vcmask 195584
      %v859 = vsel %vm858, %v850, %v726
      %v860 = vsel %vm858, %v851, %v728
      %v861 = vsel %vm858, %v852, %v730
      %v862 = vsel %vm858, %v853, %v732
      %v863 = vsel %vm858, %v854, %v734
      %v864 = vsel %vm858, %v855, %v736
      %v865 = vsel %vm858, %v856, %v738
      %v866 = vsel %vm858, %v857, %v740
      %vm867 = vcmask 228352
      %v868 = vsel %vm867, %v859, %v758
      %v869 = vsel %vm867, %v860, %v760
      %v870 = vsel %vm867, %v861, %v762
      %v871 = vsel %vm867, %v862, %v764
      %v872 = vsel %vm867, %v863, %v766
      %v873 = vsel %vm867, %v864, %v768
      %v874 = vsel %vm867, %v865, %v770
      %v875 = vsel %vm867, %v866, %v772
      %vm876 = vcmask 261120
      %v877 = vsel %vm876, %v868, %v790
      %v878 = vsel %vm876, %v869, %v792
      %v879 = vsel %vm876, %v870, %v794
      %v880 = vsel %vm876, %v871, %v796
      %v881 = vsel %vm876, %v872, %v798
      %v882 = vsel %vm876, %v873, %v800
      %v883 = vsel %vm876, %v874, %v802
      %v884 = vsel %vm876, %v875, %v804
      %v885 = vld [vmem:[%s1] sm:$0xff]
      %v886 = vld [vmem:[%s1 + $0x8] sm:$0xff]
      %v887 = vld [vmem:[%s1 + $0x10] sm:$0xff]
      %v888 = vld [vmem:[%s1 + $0x18] sm:$0xff]
      %v889 = vld [vmem:[%s1 + $0x20] sm:$0xf]
      %v890 = vld [vmem:[%s2] sm:$0x1]
      %v892 = vperm.slane %v890, 0
      %vm894 = vcmask 293888
      %v896 = vsel %vm894, %v877, 0
      %v899 = vsel %vm894, %v878, 0
      %v902 = vsel %vm894, %v879, 0
      %v905 = vsel %vm894, %v880, 0
      %v908 = vsel %vm894, %v881, 0
      %v911 = vsel %vm894, %v882, 0
      %v914 = vsel %vm894, %v883, 0
      %v917 = vsel %vm894, %v884, 0
      %vm919 = vcmask 1043456
      %v921 = vsel %vm919, %v889, 0
      %923 = vmatpush.msra.mxu0 0.0
      %924 = vmatpush.msra.mxu0 0.0
      %925 = vmatpush.msra.mxu0 0.0
      %926 = vmatpush.msra.mxu0 0.0
      %927 = vmatpush.msra.mxu0 0.0
      %928 = vmatpush.msra.mxu0 0.0
      %929 = vmatpush.msra.mxu0 0.0
      %930 = vmatpush.msra.mxu0 0.0
      %931 = vmatpush.msra.mxu0 0.0
      %932 = vmatpush.msra.mxu0 0.0
      %933 = vmatpush.msra.mxu0 0.0
      %934 = vmatpush.msra.mxu0 %v921
      %935 = vmatpush.msra.mxu0 %v888
      %936 = vmatpush.msra.mxu0 %v887
      %937 = vmatpush.msra.mxu0 %v886
      %938 = vmatpush.msra.mxu0 %v885
      %939 = vmatmul.f32.gmra.mxu0 %v896
      %v940 = vpop.f32.mrf.mxu0
      %v941 = vadd.f32 %v892, %v940
      %942 = vmatmul.f32.gmra.mxu0 %v899
      %v943 = vpop.f32.mrf.mxu0
      %v944 = vadd.f32 %v892, %v943
      %945 = vmatmul.f32.gmra.mxu0 %v902
      %v946 = vpop.f32.mrf.mxu0
      %v947 = vadd.f32 %v892, %v946
      %948 = vmatmul.f32.gmra.mxu0 %v905
      %v949 = vpop.f32.mrf.mxu0
      %v950 = vadd.f32 %v892, %v949
      %951 = vmatmul.f32.gmra.mxu0 %v908
      %v952 = vpop.f32.mrf.mxu0
      %v953 = vadd.f32 %v892, %v952
      %954 = vmatmul.f32.gmra.mxu0 %v911
      %v955 = vpop.f32.mrf.mxu0
      %v956 = vadd.f32 %v892, %v955
      %957 = vmatmul.f32.gmra.mxu0 %v914
      %v958 = vpop.f32.mrf.mxu0
      %v959 = vadd.f32 %v892, %v958
      %960 = vmatmul.f32.gmra.mxu0 %v917
      %v961 = vpop.f32.mrf.mxu0
      %v962 = vadd.f32 %v892, %v961
      %963 = vdwg.mxu0
      %v964 = vmax.f32 %v941, 0.0
      %v965 = vmax.f32 %v944, 0.0
      %v966 = vmax.f32 %v947, 0.0
      %v967 = vmax.f32 %v950, 0.0
      %v968 = vmax.f32 %v953, 0.0
      %v969 = vmax.f32 %v956, 0.0
      %v970 = vmax.f32 %v959, 0.0
      %v971 = vmax.f32 %v962, 0.0
      %972 = vst.msk [vmem:[#allocation2] sm:$0xff] %vm822, 0.0
      %vm973 = vcmask 58368
      %974 = vst.msk [vmem:[#allocation2 + $0x8] sm:$0x3] %vm973, 0.0
      %975 = vst.msk [vmem:[#allocation2 + $0x10] sm:$0xff] %vm822, 0.0
      %976 = vst.msk [vmem:[#allocation2 + $0x18] sm:$0x3] %vm973, 0.0
      %977 = vst.msk [vmem:[#allocation2 + $0x20] sm:$0xff] %vm822, 0.0
      %978 = vst.msk [vmem:[#allocation2 + $0x28] sm:$0x3] %vm973, 0.0
      %979 = vst.msk [vmem:[#allocation2 + $0x30] sm:$0xff] %vm822, 0.0
      %980 = vst.msk [vmem:[#allocation2 + $0x38] sm:$0x3] %vm973, 0.0
      %981 = vst.msk [vmem:[#allocation2 + $0x40] sm:$0xff] %vm822, 0.0
      %982 = vst.msk [vmem:[#allocation2 + $0x48] sm:$0x3] %vm973, 0.0
      %983 = vst.msk [vmem:[#allocation2 + $0x50] sm:$0xff] %vm822, 0.0
      %984 = vst.msk [vmem:[#allocation2 + $0x58] sm:$0x3] %vm973, 0.0
      %985 = vst.msk [vmem:[#allocation2 + $0x60] sm:$0xff] %vm822, 0.0
      %986 = vst.msk [vmem:[#allocation2 + $0x68] sm:$0x3] %vm973, 0.0
      %987 = vst.msk [vmem:[#allocation2 + $0x70] sm:$0xff] %vm822, 0.0
      %988 = vst.msk [vmem:[#allocation2 + $0x78] sm:$0x3] %vm973, 0.0
      %989 = vst.msk [vmem:[#allocation2 + $0x80] sm:$0xff] %vm822, 0.0
      %990 = vst.msk [vmem:[#allocation2 + $0x88] sm:$0x3] %vm973, 0.0
      %991 = vst.msk [vmem:[#allocation2 + $0x90] sm:$0xff] %vm822, 0.0
      %992 = vst.msk [vmem:[#allocation2 + $0x98] sm:$0x3] %vm973, 0.0
      %s993 = scalar_lea.vmem [#allocation2], 16
      %994 = vst.msk [vmem:[%s993 + $0x1] sm:$0xff] %vm822, %v964
      %995 = vst.msk [vmem:[%s993 + $0x11] sm:$0xff] %vm822, %v965
      %996 = vst.msk [vmem:[%s993 + $0x21] sm:$0xff] %vm822, %v966
      %997 = vst.msk [vmem:[%s993 + $0x31] sm:$0xff] %vm822, %v967
      %998 = vst.msk [vmem:[%s993 + $0x41] sm:$0xff] %vm822, %v968
      %999 = vst.msk [vmem:[%s993 + $0x51] sm:$0xff] %vm822, %v969
      %1000 = vst.msk [vmem:[%s993 + $0x61] sm:$0xff] %vm822, %v970
      %1001 = vst.msk [vmem:[%s993 + $0x71] sm:$0xff] %vm822, %v971
      %v1002 = vld [vmem:[#allocation2] ss:$2 sm:$0xf]
      %s1003 = scalar_lea.vmem [#allocation2], 32
      %v1004 = vld [vmem:[%s1003] ss:$2 sm:$0xf]
      %s1005 = scalar_lea.vmem [#allocation2], 64
      %v1006 = vld [vmem:[%s1005] ss:$2 sm:$0xf]
      %s1007 = scalar_lea.vmem [#allocation2], 96
      %v1008 = vld [vmem:[%s1007] ss:$2 sm:$0xf]
      %s1009 = scalar_lea.vmem [#allocation2], 1
      %v1010 = vld [vmem:[%s1009] ss:$2 sm:$0xf]
      %s1011 = scalar_lea.vmem [#allocation2], 33
      %v1012 = vld [vmem:[%s1011] ss:$2 sm:$0xf]
      %s1013 = scalar_lea.vmem [#allocation2], 65
      %v1014 = vld [vmem:[%s1013] ss:$2 sm:$0xf]
      %s1015 = scalar_lea.vmem [#allocation2], 97
      %v1016 = vld [vmem:[%s1015] ss:$2 sm:$0xf]
      %s1017 = scalar_lea.vmem [#allocation2], 2
      %v1018 = vld [vmem:[%s1017] ss:$2 sm:$0xf]
      %s1019 = scalar_lea.vmem [#allocation2], 34
      %v1020 = vld [vmem:[%s1019] ss:$2 sm:$0xf]
      %s1021 = scalar_lea.vmem [#allocation2], 66
      %v1022 = vld [vmem:[%s1021] ss:$2 sm:$0xf]
      %s1023 = scalar_lea.vmem [#allocation2], 98
      %v1024 = vld [vmem:[%s1023] ss:$2 sm:$0xf]
      %v1025 = vld [vmem:[%s993] ss:$2 sm:$0xf]
      %s1026 = scalar_lea.vmem %s993, 32 [#allocation2]
      %v1027 = vld [vmem:[%s1026] ss:$2 sm:$0xf]
      %s1028 = scalar_lea.vmem %s993, 64 [#allocation2]
      %v1029 = vld [vmem:[%s1028] ss:$2 sm:$0xf]
      %s1030 = scalar_lea.vmem %s993, 96 [#allocation2]
      %v1031 = vld [vmem:[%s1030] ss:$2 sm:$0xf]
      %s1032 = scalar_lea.vmem %s993, 1 [#allocation2]
      %v1033 = vld [vmem:[%s1032] ss:$2 sm:$0xf]
      %s1034 = scalar_lea.vmem %s993, 33 [#allocation2]
      %v1035 = vld [vmem:[%s1034] ss:$2 sm:$0xf]
      %s1036 = scalar_lea.vmem %s993, 65 [#allocation2]
      %v1037 = vld [vmem:[%s1036] ss:$2 sm:$0xf]
      %s1038 = scalar_lea.vmem %s993, 97 [#allocation2]
      %v1039 = vld [vmem:[%s1038] ss:$2 sm:$0xf]
      %s1040 = scalar_lea.vmem %s993, 2 [#allocation2]
      %v1041 = vld [vmem:[%s1040] ss:$2 sm:$0xf]
      %s1042 = scalar_lea.vmem %s993, 34 [#allocation2]
      %v1043 = vld [vmem:[%s1042] ss:$2 sm:$0xf]
      %s1044 = scalar_lea.vmem %s993, 66 [#allocation2]
      %v1045 = vld [vmem:[%s1044] ss:$2 sm:$0xf]
      %s1046 = scalar_lea.vmem %s993, 98 [#allocation2]
      %v1047 = vld [vmem:[%s1046] ss:$2 sm:$0xf]
      %s1048 = scalar_lea.vmem [#allocation2], 32
      %v1049 = vld [vmem:[%s1048] ss:$2 sm:$0xf]
      %s1050 = scalar_lea.vmem %s1048, 32 [#allocation2]
      %v1051 = vld [vmem:[%s1050] ss:$2 sm:$0xf]
      %s1052 = scalar_lea.vmem %s1048, 64 [#allocation2]
      %v1053 = vld [vmem:[%s1052] ss:$2 sm:$0xf]
      %s1054 = scalar_lea.vmem %s1048, 96 [#allocation2]
      %v1055 = vld [vmem:[%s1054] ss:$2 sm:$0xf]
      %s1056 = scalar_lea.vmem %s1048, 1 [#allocation2]
      %v1057 = vld [vmem:[%s1056] ss:$2 sm:$0xf]
      %s1058 = scalar_lea.vmem %s1048, 33 [#allocation2]
      %v1059 = vld [vmem:[%s1058] ss:$2 sm:$0xf]
      %s1060 = scalar_lea.vmem %s1048, 65 [#allocation2]
      %v1061 = vld [vmem:[%s1060] ss:$2 sm:$0xf]
      %s1062 = scalar_lea.vmem %s1048, 97 [#allocation2]
      %v1063 = vld [vmem:[%s1062] ss:$2 sm:$0xf]
      %s1064 = scalar_lea.vmem %s1048, 2 [#allocation2]
      %v1065 = vld [vmem:[%s1064] ss:$2 sm:$0xf]
      %s1066 = scalar_lea.vmem %s1048, 34 [#allocation2]
      %v1067 = vld [vmem:[%s1066] ss:$2 sm:$0xf]
      %s1068 = scalar_lea.vmem %s1048, 66 [#allocation2]
      %v1069 = vld [vmem:[%s1068] ss:$2 sm:$0xf]
      %s1070 = scalar_lea.vmem %s1048, 98 [#allocation2]
      %v1071 = vld [vmem:[%s1070] ss:$2 sm:$0xf]
      %1076 = vrot.lane.b32.xlu0 %v1010, 8
      %v1077 = vpop.permute.xlu0 %1076
      %1078 = vrot.lane.b32.xlu0 %v1012, 8
      %v1079 = vpop.permute.xlu0 %1078
      %1080 = vrot.lane.b32.xlu0 %v1014, 8
      %v1081 = vpop.permute.xlu0 %1080
      %1082 = vrot.lane.b32.xlu0 %v1016, 8
      %v1083 = vpop.permute.xlu0 %1082
      %1092 = vrot.lane.b32.xlu0 %v1018, 16
      %v1093 = vpop.permute.xlu0 %1092
      %1094 = vrot.lane.b32.xlu0 %v1020, 16
      %v1095 = vpop.permute.xlu0 %1094
      %1096 = vrot.lane.b32.xlu0 %v1022, 16
      %v1097 = vpop.permute.xlu0 %1096
      %1098 = vrot.lane.b32.xlu0 %v1024, 16
      %v1099 = vpop.permute.xlu0 %1098
      %1108 = vrot.lane.b32.xlu0 %v1025, 24
      %v1109 = vpop.permute.xlu0 %1108
      %1110 = vrot.lane.b32.xlu0 %v1027, 24
      %v1111 = vpop.permute.xlu0 %1110
      %1112 = vrot.lane.b32.xlu0 %v1029, 24
      %v1113 = vpop.permute.xlu0 %1112
      %1114 = vrot.lane.b32.xlu0 %v1031, 24
      %v1115 = vpop.permute.xlu0 %1114
      %1124 = vrot.lane.b32.xlu0 %v1033, 32
      %v1125 = vpop.permute.xlu0 %1124
      %1126 = vrot.lane.b32.xlu0 %v1035, 32
      %v1127 = vpop.permute.xlu0 %1126
      %1128 = vrot.lane.b32.xlu0 %v1037, 32
      %v1129 = vpop.permute.xlu0 %1128
      %1130 = vrot.lane.b32.xlu0 %v1039, 32
      %v1131 = vpop.permute.xlu0 %1130
      %1140 = vrot.lane.b32.xlu0 %v1041, 40
      %v1141 = vpop.permute.xlu0 %1140
      %1142 = vrot.lane.b32.xlu0 %v1043, 40
      %v1143 = vpop.permute.xlu0 %1142
      %1144 = vrot.lane.b32.xlu0 %v1045, 40
      %v1145 = vpop.permute.xlu0 %1144
      %1146 = vrot.lane.b32.xlu0 %v1047, 40
      %v1147 = vpop.permute.xlu0 %1146
      %1156 = vrot.lane.b32.xlu0 %v1049, 48
      %v1157 = vpop.permute.xlu0 %1156
      %1158 = vrot.lane.b32.xlu0 %v1051, 48
      %v1159 = vpop.permute.xlu0 %1158
      %1160 = vrot.lane.b32.xlu0 %v1053, 48
      %v1161 = vpop.permute.xlu0 %1160
      %1162 = vrot.lane.b32.xlu0 %v1055, 48
      %v1163 = vpop.permute.xlu0 %1162
      %1172 = vrot.lane.b32.xlu0 %v1057, 56
      %v1173 = vpop.permute.xlu0 %1172
      %1174 = vrot.lane.b32.xlu0 %v1059, 56
      %v1175 = vpop.permute.xlu0 %1174
      %1176 = vrot.lane.b32.xlu0 %v1061, 56
      %v1177 = vpop.permute.xlu0 %1176
      %1178 = vrot.lane.b32.xlu0 %v1063, 56
      %v1179 = vpop.permute.xlu0 %1178
      %1188 = vrot.lane.b32.xlu0 %v1065, 64
      %v1189 = vpop.permute.xlu0 %1188
      %1190 = vrot.lane.b32.xlu0 %v1067, 64
      %v1191 = vpop.permute.xlu0 %1190
      %1192 = vrot.lane.b32.xlu0 %v1069, 64
      %v1193 = vpop.permute.xlu0 %1192
      %1194 = vrot.lane.b32.xlu0 %v1071, 64
      %v1195 = vpop.permute.xlu0 %1194
      %v1200 = vsel %vm822, %v1002, %v1077
      %v1201 = vsel %vm822, %v1004, %v1079
      %v1202 = vsel %vm822, %v1006, %v1081
      %v1203 = vsel %vm822, %v1008, %v1083
      %v1204 = vsel %vm840, %v1200, %v1093
      %v1205 = vsel %vm840, %v1201, %v1095
      %v1206 = vsel %vm840, %v1202, %v1097
      %v1207 = vsel %vm840, %v1203, %v1099
      %v1208 = vsel %vm858, %v1204, %v1109
      %v1209 = vsel %vm858, %v1205, %v1111
      %v1210 = vsel %vm858, %v1206, %v1113
      %v1211 = vsel %vm858, %v1207, %v1115
      %v1212 = vsel %vm876, %v1208, %v1125
      %v1213 = vsel %vm876, %v1209, %v1127
      %v1214 = vsel %vm876, %v1210, %v1129
      %v1215 = vsel %vm876, %v1211, %v1131
      %vm1216 = vcmask 326656
      %v1217 = vsel %vm1216, %v1212, %v1141
      %v1218 = vsel %vm1216, %v1213, %v1143
      %v1219 = vsel %vm1216, %v1214, %v1145
      %v1220 = vsel %vm1216, %v1215, %v1147
      %vm1221 = vcmask 392192
      %v1222 = vsel %vm1221, %v1217, %v1157
      %v1223 = vsel %vm1221, %v1218, %v1159
      %v1224 = vsel %vm1221, %v1219, %v1161
      %v1225 = vsel %vm1221, %v1220, %v1163
      %vm1226 = vcmask 457728
      %v1227 = vsel %vm1226, %v1222, %v1173
      %v1228 = vsel %vm1226, %v1223, %v1175
      %v1229 = vsel %vm1226, %v1224, %v1177
      %v1230 = vsel %vm1226, %v1225, %v1179
      %vm1231 = vcmask 523264
      %v1232 = vsel %vm1231, %v1227, %v1189
      %v1233 = vsel %vm1231, %v1228, %v1191
      %v1234 = vsel %vm1231, %v1229, %v1193
      %v1235 = vsel %vm1231, %v1230, %v1195
      %v1236 = vld [vmem:[%s3] sm:$0xff]
      %v1237 = vld [vmem:[%s3 + $0x8] sm:$0xff]
      %v1238 = vld [vmem:[%s3 + $0x10] sm:$0xff]
      %v1239 = vld [vmem:[%s3 + $0x18] sm:$0xff]
      %v1240 = vld [vmem:[%s3 + $0x20] sm:$0xff]
      %v1241 = vld [vmem:[%s3 + $0x28] sm:$0xff]
      %v1242 = vld [vmem:[%s3 + $0x30] sm:$0xff]
      %v1243 = vld [vmem:[%s3 + $0x38] sm:$0xff]
      %v1244 = vld [vmem:[%s3 + $0x40] sm:$0xff]
      %v1245 = vld [vmem:[%s4] sm:$0x1]
      %v1247 = vperm.slane %v1245, 0
      %1253 = vst [vmem:[#allocation1] ss:$2 sm:$0xff] %v1232
      %s1254 = scalar_lea.vmem [#allocation1], 1
      %1255 = vst [vmem:[%s1254] ss:$2 sm:$0xff] %v1233
      %s1256 = scalar_lea.vmem [#allocation1], 16
      %1257 = vst [vmem:[%s1256] ss:$2 sm:$0xff] %v1234
      %s1258 = scalar_lea.vmem [#allocation1], 17
      %1259 = vst [vmem:[%s1258] ss:$2 sm:$0xff] %v1235
      %v1260 = vld.sshfl [vmem:[#allocation1] sm:$0xff pattern:$0x75316420]
      %v1261 = vld.sshfl [vmem:[#allocation1 + $0x10] sm:$0xff pattern:$0x75316420]
      %vm1262 = vcmask 588800
      %v1263 = vsel %vm1262, %v1260, 0
      %v1265 = vsel %vm1262, %v1261, 0
      %1267 = vmatpush.msra.mxu0 0.0
      %1268 = vmatpush.msra.mxu0 0.0
      %1269 = vmatpush.msra.mxu0 0.0
      %1270 = vmatpush.msra.mxu0 0.0
      %1271 = vmatpush.msra.mxu0 0.0
      %1272 = vmatpush.msra.mxu0 0.0
      %1273 = vmatpush.msra.mxu0 0.0
      %1274 = vmatpush.msra.mxu0 %v1244
      %1275 = vmatpush.msra.mxu0 %v1243
      %1276 = vmatpush.msra.mxu0 %v1242
      %1277 = vmatpush.msra.mxu0 %v1241
      %1278 = vmatpush.msra.mxu0 %v1240
      %1279 = vmatpush.msra.mxu0 %v1239
      %1280 = vmatpush.msra.mxu0 %v1238
      %1281 = vmatpush.msra.mxu0 %v1237
      %1282 = vmatpush.msra.mxu0 %v1236
      %1283 = vmatmul.f32.gmra.mxu0 %v1263
      %v1284 = vpop.f32.mrf.mxu0
      %v1285 = vadd.f32 %v1247, %v1284
      %1286 = vmatmul.f32.gmra.mxu0 %v1265
      %v1287 = vpop.f32.mrf.mxu0
      %v1288 = vadd.f32 %v1247, %v1287
      %1289 = vdwg.mxu0
      %v1290 = vmax.f32 %v1285, 0.0
      %v1291 = vmax.f32 %v1288, 0.0
      %v1292 = vld [vmem:[%s5] sm:$0xff]
      %v1293 = vld [vmem:[%s6] sm:$0xff]
      %v1294 = vld [vmem:[%s6 + $0x8] sm:$0xff]
      %v1296 = vsel %vm840, %v1290, 0
      %v1299 = vsel %vm840, %v1291, 0
      %1301 = vmatpush.msra.mxu0 0.0
      %1302 = vmatpush.msra.mxu0 0.0
      %1303 = vmatpush.msra.mxu0 0.0
      %1304 = vmatpush.msra.mxu0 0.0
      %1305 = vmatpush.msra.mxu0 0.0
      %1306 = vmatpush.msra.mxu0 0.0
      %1307 = vmatpush.msra.mxu0 0.0
      %1308 = vmatpush.msra.mxu0 0.0
      %1309 = vmatpush.msra.mxu0 0.0
      %1310 = vmatpush.msra.mxu0 0.0
      %1311 = vmatpush.msra.mxu0 0.0
      %1312 = vmatpush.msra.mxu0 0.0
      %1313 = vmatpush.msra.mxu0 0.0
      %1314 = vmatpush.msra.mxu0 0.0
      %1315 = vmatpush.msra.mxu0 %v1294
      %1316 = vmatpush.msra.mxu0 %v1293
      %1317 = vmatmul.f32.gmra.mxu0 %v1296
      %v1318 = vpop.f32.mrf.mxu0
      %v1319 = vadd.f32 0.0, %v1318
      %1320 = vmatmul.f32.gmra.mxu0 %v1299
      %v1321 = vpop.f32.mrf.mxu0
      %v1322 = vadd.f32 0.0, %v1321
      %1323 = vdwg.mxu0
      %v1326 = vrot.slane %v1319, 4
      %v1327 = vrot.slane %v1322, 4
      %1330 = vst [vmem:[#allocation3] ss:$2 sm:$0xf] %v1319
      %s1331 = scalar_lea.vmem [#allocation3], 16
      %1332 = vst [vmem:[%s1331] ss:$2 sm:$0xf] %v1326
      %s1333 = scalar_lea.vmem [#allocation3], 32
      %1334 = vst [vmem:[%s1333] ss:$2 sm:$0xf] %v1322
      %s1335 = scalar_lea.vmem [#allocation3], 48
      %1336 = vst [vmem:[%s1335] ss:$2 sm:$0xf] %v1327
      %s1337 = scalar_lea.vmem [#allocation3], 1
      %1338 = vst [vmem:[%s1337] ss:$2 sm:$0xf] %v1319
      %s1339 = scalar_lea.vmem [#allocation3], 17
      %1340 = vst [vmem:[%s1339] ss:$2 sm:$0xf] %v1326
      %s1341 = scalar_lea.vmem [#allocation3], 33
      %1342 = vst [vmem:[%s1341] ss:$2 sm:$0xf] %v1322
      %s1343 = scalar_lea.vmem [#allocation3], 49
      %1344 = vst [vmem:[%s1343] ss:$2 sm:$0xf] %v1327
      %s1345 = scalar_lea.vmem [#allocation3], 8
      %1346 = vst [vmem:[%s1345] ss:$2 sm:$0xf] %v1319
      %s1347 = scalar_lea.vmem %s1345, 16 [#allocation3]
      %1348 = vst [vmem:[%s1347] ss:$2 sm:$0xf] %v1326
      %s1349 = scalar_lea.vmem %s1345, 32 [#allocation3]
      %1350 = vst [vmem:[%s1349] ss:$2 sm:$0xf] %v1322
      %s1351 = scalar_lea.vmem %s1345, 48 [#allocation3]
      %1352 = vst [vmem:[%s1351] ss:$2 sm:$0xf] %v1327
      %s1353 = scalar_lea.vmem %s1345, 1 [#allocation3]
      %1354 = vst [vmem:[%s1353] ss:$2 sm:$0xf] %v1319
      %s1355 = scalar_lea.vmem %s1345, 17 [#allocation3]
      %1356 = vst [vmem:[%s1355] ss:$2 sm:$0xf] %v1326
      %s1357 = scalar_lea.vmem %s1345, 33 [#allocation3]
      %1358 = vst [vmem:[%s1357] ss:$2 sm:$0xf] %v1322
      %s1359 = scalar_lea.vmem %s1345, 49 [#allocation3]
      %1360 = vst [vmem:[%s1359] ss:$2 sm:$0xf] %v1327
      %v1361 = vld [vmem:[#allocation3] sm:$0xff]
      %v1362 = vld [vmem:[#allocation3 + $0x8] sm:$0xff]
      %v1363 = vld [vmem:[#allocation3 + $0x10] sm:$0xff]
      %v1364 = vld [vmem:[#allocation3 + $0x18] sm:$0xff]
      %v1365 = vld [vmem:[#allocation3 + $0x20] sm:$0xff]
      %v1366 = vld [vmem:[#allocation3 + $0x28] sm:$0xff]
      %v1367 = vld [vmem:[#allocation3 + $0x30] sm:$0xff]
      %v1368 = vld [vmem:[#allocation3 + $0x38] sm:$0xff]
      %v1370 = vsel %vm822, %v964, 0
      %v1373 = vsel %vm822, %v965, 0
      %v1376 = vsel %vm822, %v966, 0
      %v1379 = vsel %vm822, %v967, 0
      %v1382 = vsel %vm822, %v968, 0
      %v1385 = vsel %vm822, %v969, 0
      %v1388 = vsel %vm822, %v970, 0
      %v1391 = vsel %vm822, %v971, 0
      %1393 = vmatpush.msra.mxu0 0.0
      %1394 = vmatpush.msra.mxu0 0.0
      %1395 = vmatpush.msra.mxu0 0.0
      %1396 = vmatpush.msra.mxu0 0.0
      %1397 = vmatpush.msra.mxu0 0.0
      %1398 = vmatpush.msra.mxu0 0.0
      %1399 = vmatpush.msra.mxu0 0.0
      %1400 = vmatpush.msra.mxu0 0.0
      %1401 = vmatpush.msra.mxu0 0.0
      %1402 = vmatpush.msra.mxu0 0.0
      %1403 = vmatpush.msra.mxu0 0.0
      %1404 = vmatpush.msra.mxu0 0.0
      %1405 = vmatpush.msra.mxu0 0.0
      %1406 = vmatpush.msra.mxu0 0.0
      %1407 = vmatpush.msra.mxu0 0.0
      %1408 = vmatpush.msra.mxu0 %v1292
      %1409 = vmatmul.f32.gmra.mxu0 %v1370
      %v1410 = vpop.f32.mrf.mxu0
      %v1411 = vadd.f32 %v1361, %v1410
      %1412 = vmatmul.f32.gmra.mxu0 %v1373
      %v1413 = vpop.f32.mrf.mxu0
      %v1414 = vadd.f32 %v1362, %v1413
      %1415 = vmatmul.f32.gmra.mxu0 %v1376
      %v1416 = vpop.f32.mrf.mxu0
      %v1417 = vadd.f32 %v1363, %v1416
      %1418 = vmatmul.f32.gmra.mxu0 %v1379
      %v1419 = vpop.f32.mrf.mxu0
      %v1420 = vadd.f32 %v1364, %v1419
      %1421 = vmatmul.f32.gmra.mxu0 %v1382
      %v1422 = vpop.f32.mrf.mxu0
      %v1423 = vadd.f32 %v1365, %v1422
      %1424 = vmatmul.f32.gmra.mxu0 %v1385
      %v1425 = vpop.f32.mrf.mxu0
      %v1426 = vadd.f32 %v1366, %v1425
      %1427 = vmatmul.f32.gmra.mxu0 %v1388
      %v1428 = vpop.f32.mrf.mxu0
      %v1429 = vadd.f32 %v1367, %v1428
      %1430 = vmatmul.f32.gmra.mxu0 %v1391
      %v1431 = vpop.f32.mrf.mxu0
      %v1432 = vadd.f32 %v1368, %v1431
      %1433 = vdwg.mxu0
      %v1434 = vld [vmem:[%s7] sm:$0x1]
      %v1436 = vperm.slane %v1434, 0
      %v1438 = vadd.f32 %v1411, %v1436
      %v1439 = vadd.f32 %v1414, %v1436
      %v1440 = vadd.f32 %v1417, %v1436
      %v1441 = vadd.f32 %v1420, %v1436
      %v1442 = vadd.f32 %v1423, %v1436
      %v1443 = vadd.f32 %v1426, %v1436
      %v1444 = vadd.f32 %v1429, %v1436
      %v1445 = vadd.f32 %v1432, %v1436
      %v1446 = vmax.f32 %v1438, 0.0
      %v1447 = vmax.f32 %v1439, 0.0
      %v1448 = vmax.f32 %v1440, 0.0
      %v1449 = vmax.f32 %v1441, 0.0
      %v1450 = vmax.f32 %v1442, 0.0
      %v1451 = vmax.f32 %v1443, 0.0
      %v1452 = vmax.f32 %v1444, 0.0
      %v1453 = vmax.f32 %v1445, 0.0
      %v1454 = vld [vmem:[%s8] sm:$0xff]
      %v1455 = vld [vmem:[%s8 + $0x8] sm:$0xff]
      %v1456 = vld [vmem:[%s9] sm:$0x1]
      %v1458 = vperm.slane %v1456, 0
      %v1461 = vsel %vm840, %v1446, 0
      %v1464 = vsel %vm840, %v1447, 0
      %v1467 = vsel %vm840, %v1448, 0
      %v1470 = vsel %vm840, %v1449, 0
      %v1473 = vsel %vm840, %v1450, 0
      %v1476 = vsel %vm840, %v1451, 0
      %v1479 = vsel %vm840, %v1452, 0
      %v1482 = vsel %vm840, %v1453, 0
      %1484 = vmatpush.msra.mxu0 0.0
      %1485 = vmatpush.msra.mxu0 0.0
      %1486 = vmatpush.msra.mxu0 0.0
      %1487 = vmatpush.msra.mxu0 0.0
      %1488 = vmatpush.msra.mxu0 0.0
      %1489 = vmatpush.msra.mxu0 0.0
      %1490 = vmatpush.msra.mxu0 0.0
      %1491 = vmatpush.msra.mxu0 0.0
      %1492 = vmatpush.msra.mxu0 0.0
      %1493 = vmatpush.msra.mxu0 0.0
      %1494 = vmatpush.msra.mxu0 0.0
      %1495 = vmatpush.msra.mxu0 0.0
      %1496 = vmatpush.msra.mxu0 0.0
      %1497 = vmatpush.msra.mxu0 0.0
      %1498 = vmatpush.msra.mxu0 %v1455
      %1499 = vmatpush.msra.mxu0 %v1454
      %1500 = vmatmul.f32.gmra.mxu0 %v1461
      %v1501 = vpop.f32.mrf.mxu0
      %v1502 = vadd.f32 %v1458, %v1501
      %1503 = vmatmul.f32.gmra.mxu0 %v1464
      %v1504 = vpop.f32.mrf.mxu0
      %v1505 = vadd.f32 %v1458, %v1504
      %1506 = vmatmul.f32.gmra.mxu0 %v1467
      %v1507 = vpop.f32.mrf.mxu0
      %v1508 = vadd.f32 %v1458, %v1507
      %1509 = vmatmul.f32.gmra.mxu0 %v1470
      %v1510 = vpop.f32.mrf.mxu0
      %v1511 = vadd.f32 %v1458, %v1510
      %1512 = vmatmul.f32.gmra.mxu0 %v1473
      %v1513 = vpop.f32.mrf.mxu0
      %v1514 = vadd.f32 %v1458, %v1513
      %1515 = vmatmul.f32.gmra.mxu0 %v1476
      %v1516 = vpop.f32.mrf.mxu0
      %v1517 = vadd.f32 %v1458, %v1516
      %1518 = vmatmul.f32.gmra.mxu0 %v1479
      %v1519 = vpop.f32.mrf.mxu0
      %v1520 = vadd.f32 %v1458, %v1519
      %1521 = vmatmul.f32.gmra.mxu0 %v1482
      %v1522 = vpop.f32.mrf.mxu0
      %v1523 = vadd.f32 %v1458, %v1522
      %1524 = vdwg.mxu0
      %v1525 = vld [vmem:[%s10] sm:$0xff]
      %v1526 = vld [vmem:[%s10 + $0x8] sm:$0xff]
      %v1527 = vld [vmem:[%s11] sm:$0x1]
      %v1529 = vperm.slane %v1527, 0
      %1531 = vmatpush.msra.mxu0 0.0
      %1532 = vmatpush.msra.mxu0 0.0
      %1533 = vmatpush.msra.mxu0 0.0
      %1534 = vmatpush.msra.mxu0 0.0
      %1535 = vmatpush.msra.mxu0 0.0
      %1536 = vmatpush.msra.mxu0 0.0
      %1537 = vmatpush.msra.mxu0 0.0
      %1538 = vmatpush.msra.mxu0 0.0
      %1539 = vmatpush.msra.mxu0 0.0
      %1540 = vmatpush.msra.mxu0 0.0
      %1541 = vmatpush.msra.mxu0 0.0
      %1542 = vmatpush.msra.mxu0 0.0
      %1543 = vmatpush.msra.mxu0 0.0
      %1544 = vmatpush.msra.mxu0 0.0
      %1545 = vmatpush.msra.mxu0 %v1526
      %1546 = vmatpush.msra.mxu0 %v1525
      %1547 = vmatmul.f32.gmra.mxu0 %v1296
      %v1548 = vpop.f32.mrf.mxu0
      %v1549 = vadd.f32 %v1529, %v1548
      %1550 = vmatmul.f32.gmra.mxu0 %v1299
      %v1551 = vpop.f32.mrf.mxu0
      %v1552 = vadd.f32 %v1529, %v1551
      %1553 = vdwg.mxu0
      %1554 = vst [vmem:[%s413] sm:$0xff] 0.0
      %1555 = vst [vmem:[%s413 + $0x8] sm:$0xff] 0.0
      %1556 = vst [vmem:[%s413 + $0x10] sm:$0xff] 0.0
      %1557 = vst [vmem:[%s413 + $0x18] sm:$0xff] 0.0
      %1558 = vst [vmem:[%s413 + $0x20] sm:$0xff] 0.0
      %1559 = vst [vmem:[%s413 + $0x28] sm:$0xff] 0.0
      %1560 = vst [vmem:[%s413 + $0x30] sm:$0xff] 0.0
      %1561 = vst [vmem:[%s413 + $0x38] sm:$0xff] 0.0
      %vm1562 = vcmask 23552
      %1563 = vst.msk [vmem:[%s413] sm:$0xff] %vm1562, %v1502
      %1564 = vst.msk [vmem:[%s413 + $0x8] sm:$0xff] %vm1562, %v1505
      %1565 = vst.msk [vmem:[%s413 + $0x10] sm:$0xff] %vm1562, %v1508
      %1566 = vst.msk [vmem:[%s413 + $0x18] sm:$0xff] %vm1562, %v1511
      %1567 = vst.msk [vmem:[%s413 + $0x20] sm:$0xff] %vm1562, %v1514
      %1568 = vst.msk [vmem:[%s413 + $0x28] sm:$0xff] %vm1562, %v1517
      %1569 = vst.msk [vmem:[%s413 + $0x30] sm:$0xff] %vm1562, %v1520
      %1570 = vst.msk [vmem:[%s413 + $0x38] sm:$0xff] %vm1562, %v1523
      %1573 = vrot.lane.b32.xlu0 %v1549, 8
      %v1574 = vpop.permute.xlu0 %1573
      %1575 = vrot.lane.b32.xlu0 %v1552, 8
      %v1576 = vpop.permute.xlu0 %1575
      %vm1579 = vcmask 89152
      %1580 = vst.msk [vmem:[%s413] sm:$0xff] %vm1579, %v1574
      %1581 = vst.msk [vmem:[%s413 + $0x8] sm:$0xff] %vm1579, %v1576
      %p1582 = scmp.lt.s32.totalorder %s23, 1
      %s1583 = scalar_select %p1582, %s23, 1
      %s1584 = smul.addr %s1583, 8
      %s1585 = smul.addr %s1584, 8
      %s1586 = scalar_lea.vmem %s12, %s1585
      // Predicated region
      $region69: #{segmenter_forward.1} parent=67 // pred_check
        %p1587 = pneg %p298
      $region70: #{segmenter_forward.1} parent=67 // pred_check_branch
        %1589 = sbr.rel (%p1587) target = $region72
      $region71: #{segmenter_forward.1} parent=67 // pred_region
        _
      $region72: #{segmenter_forward.1} parent=67 // pred_fallthru
        _
    $region68: #{segmenter_forward.1} parent=5 // pred_fallthru
      _
    %p1590 = scmp.le.s32.totalorder 2, %s18
    // Predicated region
    $region73: #{segmenter_forward.1} parent=5 // pred_check
      %p1591 = pneg %p1590
    $region74: #{segmenter_forward.1} parent=5 // pred_check_branch
      %1593 = sbr.rel (%p1591) target = $region76
    $region75: #{segmenter_forward.1} parent=5 // pred_region
      %s1594 = ssub.s32 %s18, 2
      // Predicated region
      $region77: #{segmenter_forward.1} parent=75 // pred_check
        %p1595 = pneg %p304
      $region78: #{segmenter_forward.1} parent=75 // pred_check_branch
        %1597 = sbr.rel (%p1595) target = $region80
      $region79: #{segmenter_forward.1} parent=75 // pred_region
        %p1598 = scmp.lt.s32.totalorder %s24, 1
        %s1599 = scalar_select %p1598, %s24, 1
        %s1600 = smul.addr %s1599, 8
        %s1601 = smul.addr %s1600, 8
        %s1602 = scalar_lea.vmem %s12, %s1601
      $region80: #{segmenter_forward.1} parent=75 // pred_fallthru
        _
    $region76: #{segmenter_forward.1} parent=5 // pred_fallthru
      _
  $region6: #{segmenter_forward.1} parent=0 // loop_footer
    %s22 = sadd.s32 1, %s18
  $region7: #{segmenter_forward.1} parent=0 // loop_footer_branch
    %17 = sbr.rel target = $region3
  $region8: #{segmenter_forward.1} parent=0 // loop_exit
    _

</llo_original>
